<compile_context>
chip_gen: v6e
topology: v6e:2x2x1
jax: 0.10.0
libtpu: 0.0.40
codegen_flags: <defaults>
</compile_context>

<pallas_src>
import math

import jax
import jax.numpy as jnp
from jax import lax
from jax.experimental import pallas as pl
from jax.experimental.pallas import tpu as pltpu  # noqa: F401  (TPU backend)

# ---- small, module-consistent sizes -----------------------------------------
B = 2            # batch
S = 8            # sequence length
H = 32           # config.inner_hidden_size
NH = 4           # config.num_attn_heads
HD = H // NH     # attn_head_size
A = NH * HD      # all_head_size (== H here)
G = B * NH       # (batch, head) groups, g = b * NH + h
LN_EPS = 1e-5
INV_SQRT_HD = 1.0 / math.sqrt(HD)


def _attention_kernel(hidden_ref, mask_ref, wqv_ref, bqv_ref,
                      wd_ref, bd_ref, gamma_ref, beta_ref,
                      out_ref, score_ref):
    x3 = hidden_ref[...]                                          # (B, S, H)

    # Replicate each batch slab across its NH heads: (G, S, H), g = b*NH + h.
    # Leading-dim broadcast + merge only — no lane/sublane relayout.
    x_g = jnp.broadcast_to(x3[:, None], (B, NH, S, H)).reshape(G, S, H)

    # --- fused per-head Q(=K)/V projection: one batched MXU matmul -----------
    # Weights were packed head-major at init, so no in-kernel head split.
    qv = lax.dot_general(x_g, wqv_ref[...],
                         dimension_numbers=(((2,), (1,)), ((0,), (0,))),
                         preferred_element_type=jnp.float32) + bqv_ref[...]
    q_g = qv[:, :, :HD]                                           # (G, S, HD)
    v_g = qv[:, :, HD:]                                           # (G, S, HD)

    # --- scores for all (batch, head) groups in one batched dot (K == Q) -----
    s = lax.dot_general(q_g, q_g,
                        dimension_numbers=(((2,), (2,)), ((0,), (0,))),
                        preferred_element_type=jnp.float32) * INV_SQRT_HD

    # Mask bias hoisted: computed once, one broadcast add for every head.
    bias = mask_ref[...] * (-10000.0)                             # (B, S)
    s = s + jnp.broadcast_to(bias[:, None, None, :],
                             (B, NH, 1, S)).reshape(G, 1, S)

    # Raw (pre-softmax) attention scores: a single store of the whole block.
    score_ref[...] = s.reshape(B, NH, S, S)

    # --- softmax over keys ----------------------------------------------------
    m = jnp.max(s, axis=-1, keepdims=True)
    p = jnp.exp(s - m)
    p = p / jnp.sum(p, axis=-1, keepdims=True)

    # --- context + per-head dense projection; head merge == leading-axis sum --
    ctx = lax.dot_general(p, v_g,
                          dimension_numbers=(((2,), (1,)), ((0,), (0,))),
                          preferred_element_type=jnp.float32)     # (G, S, HD)
    d_g = lax.dot_general(ctx, wd_ref[...],
                          dimension_numbers=(((2,), (1,)), ((0,), (0,))),
                          preferred_element_type=jnp.float32)     # (G, S, H)
    dense = d_g.reshape(B, NH, S, H).sum(axis=1) + bd_ref[0]      # (B, S, H)

    # --- residual + LayerNorm (biased variance, eps = 1e-5) -------------------
    # TODO(synk): attn_dropout / hidden_dropout treated as identity (eval mode).
    res = x3 + dense
    mu = jnp.mean(res, axis=-1, keepdims=True)
    var = jnp.mean((res - mu) ** 2, axis=-1, keepdims=True)
    out_ref[...] = ((res - mu) * lax.rsqrt(var + LN_EPS)) * gamma_ref[0] + beta_ref[0]


def pack_params(params):
    """One-time (init-style) head-major repacking of the module weights."""
    wqk, bqk, wv, bv, wd, bd, gamma, beta = params
    # Per-head Q(=K) and V weights, fused along the output dim: (G, H, 2*HD).
    wq_h = wqk.reshape(H, NH, HD).transpose(1, 0, 2)              # (NH, H, HD)
    wv_h = wv.reshape(H, NH, HD).transpose(1, 0, 2)               # (NH, H, HD)
    wqv = jnp.concatenate([wq_h, wv_h], axis=2)                   # (NH, H, 2HD)
    wqv_g = jnp.broadcast_to(wqv[None], (B, NH, H, 2 * HD)).reshape(G, H, 2 * HD)
    bqv = jnp.concatenate([bqk.reshape(NH, HD), bv.reshape(NH, HD)], axis=1)
    bqv_g = jnp.broadcast_to(bqv[None], (B, NH, 2 * HD)).reshape(G, 1, 2 * HD)
    # Per-head dense projection slices: (G, HD, H).
    wd_g = jnp.broadcast_to(wd.reshape(NH, HD, H)[None],
                            (B, NH, HD, H)).reshape(G, HD, H)
    return wqv_g, bqv_g, wd_g, bd, gamma, beta


def tiny_mobilebert_attention(hidden, attn_mask, packed):
    """hidden: (B, S, H) f32, attn_mask: (B, S) f32 (1.0 = masked position).

    Returns (output (B,S,H), attn_score (B,NH,S,S)) like the PyTorch module.
    """
    wqv_g, bqv_g, wd_g, bd, gamma, beta = packed
    # Single invocation, no grid: total working set is a few KB, so all
    # operands live in VMEM as whole blocks and launch overhead is paid once.
    return pl.pallas_call(
        _attention_kernel,
        out_shape=(
            jax.ShapeDtypeStruct((B, S, H), jnp.float32),         # output
            jax.ShapeDtypeStruct((B, NH, S, S), jnp.float32),     # attn_score
        ),
    )(hidden, attn_mask, wqv_g, bqv_g, wd_g, bd, gamma, beta)


def _reference(hidden, attn_mask, params):
    """Pure-JAX reference mirroring the PyTorch forward (eval mode)."""
    wqk, bqk, wv, bv, wd, bd, gamma, beta = params
    q = hidden @ wqk + bqk[0]
    k = q                                   # key = query (shared Linear)
    v = hidden @ wv + bv[0]

    def split(t):  # (B,S,A) -> (B,NH,S,HD)
        return t.reshape(B, S, NH, HD).transpose(0, 2, 1, 3)

    qh, kh, vh = split(q), split(k), split(v)
    score = jnp.einsum("bhqd,bhkd->bhqk", qh, kh) / math.sqrt(HD)
    score = score + attn_mask[:, None, None, :] * (-10000.0)
    prob = jax.nn.softmax(score, axis=-1)
    ctx = jnp.einsum("bhqk,bhkd->bhqd", prob, vh)
    ctx = ctx.transpose(0, 2, 1, 3).reshape(B, S, A)
    dense = ctx @ wd + bd[0]
    res = hidden + dense
    mu = jnp.mean(res, axis=-1, keepdims=True)
    var = jnp.mean((res - mu) ** 2, axis=-1, keepdims=True)
    out = (res - mu) * jax.lax.rsqrt(var + LN_EPS) * gamma[0] + beta[0]
    return out, score


def _init_params(key):
    ks = jax.random.split(key, 6)
    bound_h = 1.0 / math.sqrt(H)
    bound_a = 1.0 / math.sqrt(A)
    wqk = jax.random.uniform(ks[0], (H, A), jnp.float32, -bound_h, bound_h)
    bqk = jax.random.uniform(ks[1], (1, A), jnp.float32, -bound_h, bound_h)
    wv = jax.random.uniform(ks[2], (H, A), jnp.float32, -bound_h, bound_h)
    bv = jax.random.uniform(ks[3], (1, A), jnp.float32, -bound_h, bound_h)
    wd = jax.random.uniform(ks[4], (A, H), jnp.float32, -bound_a, bound_a)
    bd = jax.random.uniform(ks[5], (1, H), jnp.float32, -bound_a, bound_a)
    gamma = jnp.ones((1, H), jnp.float32)
    beta = jnp.zeros((1, H), jnp.float32)
    return (wqk, bqk, wv, bv, wd, bd, gamma, beta)


if __name__ == "__main__":
    key = jax.random.PRNGKey(0)
    k_h, k_m, k_p = jax.random.split(key, 3)

    hidden = jax.random.normal(k_h, (B, S, H), jnp.float32)
    # attn_mask: 1.0 where masked (padding), 0.0 otherwise
    attn_mask = (jax.random.uniform(k_m, (B, S)) > 0.75).astype(jnp.float32)
    params = _init_params(k_p)
    packed = pack_params(params)            # done once, like module init

    out, score = tiny_mobilebert_attention(hidden, attn_mask, packed)
    out = jax.block_until_ready(out)
    score = jax.block_until_ready(score)

    ref_out, ref_score = _reference(hidden, attn_mask, params)
    assert jnp.allclose(out, ref_out, atol=1e-4, rtol=1e-4), "output mismatch"
    assert jnp.allclose(score, ref_score, atol=1e-4, rtol=1e-4), "score mismatch"

    print("KERNEL_OK")
</pallas_src>

<mosaic_0001>
module attributes {stable_mosaic.version = 11 : i64} {
  func.func @_attention_kernel(%arg0: memref<2x8x32xf32, #tpu.memory_space<vmem>>, %arg1: memref<2x8xf32, #tpu.memory_space<vmem>>, %arg2: memref<8x32x16xf32, #tpu.memory_space<vmem>>, %arg3: memref<8x1x16xf32, #tpu.memory_space<vmem>>, %arg4: memref<8x8x32xf32, #tpu.memory_space<vmem>>, %arg5: memref<1x32xf32, #tpu.memory_space<vmem>>, %arg6: memref<1x32xf32, #tpu.memory_space<vmem>>, %arg7: memref<1x32xf32, #tpu.memory_space<vmem>>, %arg8: memref<2x8x32xf32, #tpu.memory_space<vmem>>, %arg9: memref<2x4x8x8xf32, #tpu.memory_space<vmem>>) attributes {dimension_semantics = [], scalar_prefetch = 0 : i64, scratch_operands = 0 : i64, tpu.core_type = #tpu.core_type<tc>} {
    %c0 = arith.constant 0 : index
    %c0_0 = arith.constant 0 : index
    %c0_1 = arith.constant 0 : index
    %0 = vector.load %arg0[%c0, %c0_0, %c0_1] : memref<2x8x32xf32, #tpu.memory_space<vmem>>, vector<2x8x32xf32>
    %1 = vector.shape_cast %0 : vector<2x8x32xf32> to vector<2x1x8x32xf32>
    %2 = vector.shape_cast %1 : vector<2x1x8x32xf32> to vector<2x1x8x32xf32>
    %3 = vector.broadcast %2 : vector<2x1x8x32xf32> to vector<2x4x8x32xf32>
    %4 = vector.shape_cast %3 : vector<2x4x8x32xf32> to vector<8x8x32xf32>
    %c0_2 = arith.constant 0 : index
    %c0_3 = arith.constant 0 : index
    %c0_4 = arith.constant 0 : index
    %5 = vector.load %arg2[%c0_2, %c0_3, %c0_4] : memref<8x32x16xf32, #tpu.memory_space<vmem>>, vector<8x32x16xf32>
    %cst = arith.constant dense<0.000000e+00> : vector<8x8x16xf32>
    %6 = tpu.matmul %4, %5, %cst {dimension_numbers = #tpu.dot_dimension_numbers<[2], [1], [1], [2], [0, 0, 0, 1, 1, 2], [0], [0]>} : vector<8x8x32xf32>, vector<8x32x16xf32>, vector<8x8x16xf32> -> vector<8x8x16xf32>
    %c0_5 = arith.constant 0 : index
    %c0_6 = arith.constant 0 : index
    %c0_7 = arith.constant 0 : index
    %7 = vector.load %arg3[%c0_5, %c0_6, %c0_7] : memref<8x1x16xf32, #tpu.memory_space<vmem>>, vector<8x1x16xf32>
    %8 = vector.broadcast %7 : vector<8x1x16xf32> to vector<8x8x16xf32>
    %9 = arith.addf %6, %8 : vector<8x8x16xf32>
    %10 = vector.extract_strided_slice %9 {offsets = [0, 0, 0], sizes = [8, 8, 8], strides = [1, 1, 1]} : vector<8x8x16xf32> to vector<8x8x8xf32>
    %11 = vector.extract_strided_slice %9 {offsets = [0, 0, 8], sizes = [8, 8, 8], strides = [1, 1, 1]} : vector<8x8x16xf32> to vector<8x8x8xf32>
    %cst_8 = arith.constant dense<0.000000e+00> : vector<8x8x8xf32>
    %12 = tpu.matmul %10, %10, %cst_8 {dimension_numbers = #tpu.dot_dimension_numbers<[2], [2], [1], [1], [0, 0, 0, 1, 1, 1], [0], [0]>} : vector<8x8x8xf32>, vector<8x8x8xf32>, vector<8x8x8xf32> -> vector<8x8x8xf32>
    %cst_9 = arith.constant 0.353553385 : f32
    %13 = vector.broadcast %cst_9 : f32 to vector<8x8x8xf32>
    %14 = arith.mulf %12, %13 : vector<8x8x8xf32>
    %c0_10 = arith.constant 0 : index
    %c0_11 = arith.constant 0 : index
    %15 = vector.load %arg1[%c0_10, %c0_11] : memref<2x8xf32, #tpu.memory_space<vmem>>, vector<2x8xf32>
    %cst_12 = arith.constant -1.000000e+04 : f32
    %16 = vector.broadcast %cst_12 : f32 to vector<2x8xf32>
    %17 = arith.mulf %15, %16 : vector<2x8xf32>
    %18 = vector.shape_cast %17 : vector<2x8xf32> to vector<2x1x1x8xf32>
    %19 = vector.shape_cast %18 : vector<2x1x1x8xf32> to vector<2x1x1x8xf32>
    %20 = vector.broadcast %19 : vector<2x1x1x8xf32> to vector<2x4x1x8xf32>
    %21 = vector.shape_cast %20 : vector<2x4x1x8xf32> to vector<8x1x8xf32>
    %22 = vector.broadcast %21 : vector<8x1x8xf32> to vector<8x8x8xf32>
    %23 = arith.addf %14, %22 : vector<8x8x8xf32>
    %24 = vector.shape_cast %23 : vector<8x8x8xf32> to vector<2x4x8x8xf32>
    %c0_13 = arith.constant 0 : index
    %c0_14 = arith.constant 0 : index
    %c0_15 = arith.constant 0 : index
    %c0_16 = arith.constant 0 : index
    %25 = vector.load %arg9[%c0_13, %c0_14, %c0_15, %c0_16] : memref<2x4x8x8xf32, #tpu.memory_space<vmem>>, vector<2x4x8x8xf32>
    tpu.vector_store %arg9[%c0_13, %c0_14, %c0_15, %c0_16], %24 {strides = array<i32>} : memref<2x4x8x8xf32, #tpu.memory_space<vmem>>, vector<2x4x8x8xf32>,
    %cst_17 = arith.constant dense<0xFF800000> : vector<8x8xf32>
    %26 = vector.multi_reduction <maximumf>, %23, %cst_17 [2] : vector<8x8x8xf32> to vector<8x8xf32>
    %27 = vector.shape_cast %26 : vector<8x8xf32> to vector<8x8x1xf32>
    %28 = vector.broadcast %27 : vector<8x8x1xf32> to vector<8x8x8xf32>
    %29 = arith.subf %23, %28 : vector<8x8x8xf32>
    %30 = math.exp %29 : vector<8x8x8xf32>
    %cst_18 = arith.constant dense<0.000000e+00> : vector<8x8xf32>
    %31 = vector.multi_reduction <add>, %30, %cst_18 [2] : vector<8x8x8xf32> to vector<8x8xf32>
    %32 = vector.shape_cast %31 : vector<8x8xf32> to vector<8x8x1xf32>
    %33 = vector.broadcast %32 : vector<8x8x1xf32> to vector<8x8x8xf32>
    %34 = arith.divf %30, %33 : vector<8x8x8xf32>
    %cst_19 = arith.constant dense<0.000000e+00> : vector<8x8x8xf32>
    %35 = tpu.matmul %34, %11, %cst_19 {dimension_numbers = #tpu.dot_dimension_numbers<[2], [1], [1], [2], [0, 0, 0, 1, 1, 2], [0], [0]>} : vector<8x8x8xf32>, vector<8x8x8xf32>, vector<8x8x8xf32> -> vector<8x8x8xf32>
    %c0_20 = arith.constant 0 : index
    %c0_21 = arith.constant 0 : index
    %c0_22 = arith.constant 0 : index
    %36 = vector.load %arg4[%c0_20, %c0_21, %c0_22] : memref<8x8x32xf32, #tpu.memory_space<vmem>>, vector<8x8x32xf32>
    %cst_23 = arith.constant dense<0.000000e+00> : vector<8x8x32xf32>
    %37 = tpu.matmul %35, %36, %cst_23 {dimension_numbers = #tpu.dot_dimension_numbers<[2], [1], [1], [2], [0, 0, 0, 1, 1, 2], [0], [0]>} : vector<8x8x8xf32>, vector<8x8x32xf32>, vector<8x8x32xf32> -> vector<8x8x32xf32>
    %38 = vector.shape_cast %37 : vector<8x8x32xf32> to vector<2x4x8x32xf32>
    %cst_24 = arith.constant dense<0.000000e+00> : vector<2x8x32xf32>
    %39 = vector.multi_reduction <add>, %38, %cst_24 [1] : vector<2x4x8x32xf32> to vector<2x8x32xf32>
    %c0_25 = arith.constant 0 : index
    %c0_26 = arith.constant 0 : index
    %40 = vector.load %arg5[%c0_25, %c0_26] : memref<1x32xf32, #tpu.memory_space<vmem>>, vector<1x32xf32>
    %41 = vector.shape_cast %40 : vector<1x32xf32> to vector<32xf32>
    %42 = vector.shape_cast %41 : vector<32xf32> to vector<1x1x32xf32>
    %43 = vector.broadcast %42 : vector<1x1x32xf32> to vector<2x8x32xf32>
    %44 = arith.addf %39, %43 : vector<2x8x32xf32>
    %45 = arith.addf %0, %44 : vector<2x8x32xf32>
    %cst_27 = arith.constant dense<0.000000e+00> : vector<2x8xf32>
    %46 = vector.multi_reduction <add>, %45, %cst_27 [2] : vector<2x8x32xf32> to vector<2x8xf32>
    %47 = vector.shape_cast %46 : vector<2x8xf32> to vector<2x8x1xf32>
    %cst_28 = arith.constant 3.200000e+01 : f32
    %48 = vector.broadcast %cst_28 : f32 to vector<2x8x1xf32>
    %49 = arith.divf %47, %48 : vector<2x8x1xf32>
    %50 = vector.broadcast %49 : vector<2x8x1xf32> to vector<2x8x32xf32>
    %51 = arith.subf %45, %50 : vector<2x8x32xf32>
    %52 = arith.mulf %51, %51 : vector<2x8x32xf32>
    %cst_29 = arith.constant dense<0.000000e+00> : vector<2x8xf32>
    %53 = vector.multi_reduction <add>, %52, %cst_29 [2] : vector<2x8x32xf32> to vector<2x8xf32>
    %54 = vector.shape_cast %53 : vector<2x8xf32> to vector<2x8x1xf32>
    %cst_30 = arith.constant 3.200000e+01 : f32
    %55 = vector.broadcast %cst_30 : f32 to vector<2x8x1xf32>
    %56 = arith.divf %54, %55 : vector<2x8x1xf32>
    %57 = vector.broadcast %49 : vector<2x8x1xf32> to vector<2x8x32xf32>
    %58 = arith.subf %45, %57 : vector<2x8x32xf32>
    %cst_31 = arith.constant 9.99999974E-6 : f32
    %59 = vector.broadcast %cst_31 : f32 to vector<2x8x1xf32>
    %60 = arith.addf %56, %59 : vector<2x8x1xf32>
    %61 = math.rsqrt %60 : vector<2x8x1xf32>
    %62 = vector.broadcast %61 : vector<2x8x1xf32> to vector<2x8x32xf32>
    %63 = arith.mulf %58, %62 : vector<2x8x32xf32>
    %c0_32 = arith.constant 0 : index
    %c0_33 = arith.constant 0 : index
    %64 = vector.load %arg6[%c0_32, %c0_33] : memref<1x32xf32, #tpu.memory_space<vmem>>, vector<1x32xf32>
    %65 = vector.shape_cast %64 : vector<1x32xf32> to vector<32xf32>
    %66 = vector.shape_cast %65 : vector<32xf32> to vector<1x1x32xf32>
    %67 = vector.broadcast %66 : vector<1x1x32xf32> to vector<2x8x32xf32>
    %68 = arith.mulf %63, %67 : vector<2x8x32xf32>
    %c0_34 = arith.constant 0 : index
    %c0_35 = arith.constant 0 : index
    %69 = vector.load %arg7[%c0_34, %c0_35] : memref<1x32xf32, #tpu.memory_space<vmem>>, vector<1x32xf32>
    %70 = vector.shape_cast %69 : vector<1x32xf32> to vector<32xf32>
    %71 = vector.shape_cast %70 : vector<32xf32> to vector<1x1x32xf32>
    %72 = vector.broadcast %71 : vector<1x1x32xf32> to vector<2x8x32xf32>
    %73 = arith.addf %68, %72 : vector<2x8x32xf32>
    %c0_36 = arith.constant 0 : index
    %c0_37 = arith.constant 0 : index
    %c0_38 = arith.constant 0 : index
    %74 = vector.load %arg8[%c0_36, %c0_37, %c0_38] : memref<2x8x32xf32, #tpu.memory_space<vmem>>, vector<2x8x32xf32>
    tpu.vector_store %arg8[%c0_36, %c0_37, %c0_38], %73 {strides = array<i32>} : memref<2x8x32xf32, #tpu.memory_space<vmem>>, vector<2x8x32xf32>,
    return
  }
}

</mosaic_0001>

<llo_original>
// kernel: tpu_custom_call.1
$region0: #{tpu_custom_call.1}
  #allocation0 [shape = 'u32[]', space=smem, size = 0x4, offset = 0x4, fixed_abs, tag = 'smem constant byte address 0x4 - core index']
  #allocation1 [shape = 'u32[144,128]{1,0:T(1,128)}', space=vmem, size = 0x12000, scoped, tag = 'internal scratch']
  %s0 = inlined_call_operand.vmem [shape: f32[2,8,32], index: 0, kind: input, shape index: {}]
  %s1 = inlined_call_operand.vmem [shape: f32[2,8], index: 1, kind: input, shape index: {}]
  %s2 = inlined_call_operand.vmem [shape: f32[8,32,16], index: 2, kind: input, shape index: {}]
  %s3 = inlined_call_operand.vmem [shape: f32[8,1,16], index: 3, kind: input, shape index: {}]
  %s4 = inlined_call_operand.vmem [shape: f32[8,8,32], index: 4, kind: input, shape index: {}]
  %s5 = inlined_call_operand.vmem [shape: f32[1,32], index: 5, kind: input, shape index: {}]
  %s6 = inlined_call_operand.vmem [shape: f32[1,32], index: 6, kind: input, shape index: {}]
  %s7 = inlined_call_operand.vmem [shape: f32[1,32], index: 7, kind: input, shape index: {}]
  %s8 = inlined_call_operand.hbm [shape: f32[2,8,32], index: 8, kind: output, shape index: {0}]
  %s9 = inlined_call_operand.hbm [shape: f32[2,4,8,8], index: 9, kind: output, shape index: {1}]
  %10 = xla_tuple %s8, %s9
  %s11 = sld [smem:[#allocation0]]
  $region50: #{tpu_custom_call.1} parent=0
    _
  %s13 = ssub.s32 1, %s11
  %s14 = scalar_select 0, %s13, %s11
  $region1: #{tpu_custom_call.1} parent=0
    #allocation2 [shape = 'u8[8192]{0}', space=vmem, size = 0x2000, scoped, tag = 'output window, operand 0, single buffered']
    #allocation3 [shape = 's32[1]{0}', space=sflag, size = 0x4, scoped, tag = 'scoped memory for tpu_custom_call.1']
    #allocation4 [shape = 'u8[32768]{0}', space=vmem, size = 0x8000, scoped, tag = 'output window, operand 1, single buffered']
    #allocation5 [shape = 's32[1]{0}', space=sflag, size = 0x4, scoped, tag = 'scoped memory for tpu_custom_call.1']
    %15 = vsyncpa [#allocation3], 0
    %16 = vsyncpa [#allocation5], 0
    // Predicated region
    $region2: #{tpu_custom_call.1} parent=1 // pred_check
      _
    $region3: #{tpu_custom_call.1} parent=1 // pred_check_branch
      %18 = sbr.rel (0) target = $region5
    $region4: #{tpu_custom_call.1} parent=1 // pred_region
      _
    $region5: #{tpu_custom_call.1} parent=1 // pred_fallthru
      _
    // Predicated region
    $region6: #{tpu_custom_call.1} parent=1 // pred_check
      _
    $region7: #{tpu_custom_call.1} parent=1 // pred_check_branch
      %20 = sbr.rel (0) target = $region9
    $region8: #{tpu_custom_call.1} parent=1 // pred_region
      _
    $region9: #{tpu_custom_call.1} parent=1 // pred_fallthru
      _
    // Predicated region
    $region10: #{tpu_custom_call.1} parent=1 // pred_check
      _
    $region11: #{tpu_custom_call.1} parent=1 // pred_check_branch
      %22 = sbr.rel (0) target = $region13
    $region12: #{tpu_custom_call.1} parent=1 // pred_region
      _
    $region13: #{tpu_custom_call.1} parent=1 // pred_fallthru
      _
    // Predicated region
    $region14: #{tpu_custom_call.1} parent=1 // pred_check
      _
    $region15: #{tpu_custom_call.1} parent=1 // pred_check_branch
      %24 = sbr.rel (0) target = $region17
    $region16: #{tpu_custom_call.1} parent=1 // pred_region
      _
    $region17: #{tpu_custom_call.1} parent=1 // pred_fallthru
      _
    // Predicated region
    $region18: #{tpu_custom_call.1} parent=1 // pred_check
      _
    $region19: #{tpu_custom_call.1} parent=1 // pred_check_branch
      %26 = sbr.rel (0) target = $region21
    $region20: #{tpu_custom_call.1} parent=1 // pred_region
      _
    $region21: #{tpu_custom_call.1} parent=1 // pred_fallthru
      _
    // Predicated region
    $region22: #{tpu_custom_call.1} parent=1 // pred_check
      _
    $region23: #{tpu_custom_call.1} parent=1 // pred_check_branch
      %28 = sbr.rel (0) target = $region25
    $region24: #{tpu_custom_call.1} parent=1 // pred_region
      _
    $region25: #{tpu_custom_call.1} parent=1 // pred_fallthru
      _
    // Predicated region
    $region26: #{tpu_custom_call.1} parent=1 // pred_check
      _
    $region27: #{tpu_custom_call.1} parent=1 // pred_check_branch
      %30 = sbr.rel (0) target = $region29
    $region28: #{tpu_custom_call.1} parent=1 // pred_region
      _
    $region29: #{tpu_custom_call.1} parent=1 // pred_fallthru
      _
    // Predicated region
    $region30: #{tpu_custom_call.1} parent=1 // pred_check
      _
    $region31: #{tpu_custom_call.1} parent=1 // pred_check_branch
      %32 = sbr.rel (0) target = $region33
    $region32: #{tpu_custom_call.1} parent=1 // pred_region
      _
    $region33: #{tpu_custom_call.1} parent=1 // pred_fallthru
      _
    %v33 = vld [vmem:[%s0] sm:$0xff]
    %v34 = vld [vmem:[%s0 + $0x8] sm:$0xff]
    %v35 = vld [vmem:[%s2] sm:$0xff]
    %v36 = vld [vmem:[%s2 + $0x8] sm:$0xff]
    %v37 = vld [vmem:[%s2 + $0x10] sm:$0xff]
    %v38 = vld [vmem:[%s2 + $0x18] sm:$0xff]
    %v39 = vld [vmem:[%s2 + $0x20] sm:$0xff]
    %v40 = vld [vmem:[%s2 + $0x28] sm:$0xff]
    %v41 = vld [vmem:[%s2 + $0x30] sm:$0xff]
    %v42 = vld [vmem:[%s2 + $0x38] sm:$0xff]
    %v43 = vld [vmem:[%s2 + $0x40] sm:$0xff]
    %v44 = vld [vmem:[%s2 + $0x48] sm:$0xff]
    %v45 = vld [vmem:[%s2 + $0x50] sm:$0xff]
    %v46 = vld [vmem:[%s2 + $0x58] sm:$0xff]
    %v47 = vld [vmem:[%s2 + $0x60] sm:$0xff]
    %v48 = vld [vmem:[%s2 + $0x68] sm:$0xff]
    %v49 = vld [vmem:[%s2 + $0x70] sm:$0xff]
    %v50 = vld [vmem:[%s2 + $0x78] sm:$0xff]
    %v51 = vld [vmem:[%s2 + $0x80] sm:$0xff]
    %v52 = vld [vmem:[%s2 + $0x88] sm:$0xff]
    %v53 = vld [vmem:[%s2 + $0x90] sm:$0xff]
    %v54 = vld [vmem:[%s2 + $0x98] sm:$0xff]
    %v55 = vld [vmem:[%s2 + $0xa0] sm:$0xff]
    %v56 = vld [vmem:[%s2 + $0xa8] sm:$0xff]
    %v57 = vld [vmem:[%s2 + $0xb0] sm:$0xff]
    %v58 = vld [vmem:[%s2 + $0xb8] sm:$0xff]
    %v59 = vld [vmem:[%s2 + $0xc0] sm:$0xff]
    %v60 = vld [vmem:[%s2 + $0xc8] sm:$0xff]
    %v61 = vld [vmem:[%s2 + $0xd0] sm:$0xff]
    %v62 = vld [vmem:[%s2 + $0xd8] sm:$0xff]
    %v63 = vld [vmem:[%s2 + $0xe0] sm:$0xff]
    %v64 = vld [vmem:[%s2 + $0xe8] sm:$0xff]
    %v65 = vld [vmem:[%s2 + $0xf0] sm:$0xff]
    %v66 = vld [vmem:[%s2 + $0xf8] sm:$0xff]
    %v67 = vld [vmem:[%s3] sm:$0x1]
    %v68 = vld [vmem:[%s3 + $0x1] sm:$0x1]
    %v69 = vld [vmem:[%s3 + $0x2] sm:$0x1]
    %v70 = vld [vmem:[%s3 + $0x3] sm:$0x1]
    %v71 = vld [vmem:[%s3 + $0x4] sm:$0x1]
    %v72 = vld [vmem:[%s3 + $0x5] sm:$0x1]
    %v73 = vld [vmem:[%s3 + $0x6] sm:$0x1]
    %v74 = vld [vmem:[%s3 + $0x7] sm:$0x1]
    %v83 = vlaneseq
    %v84 = vshrl.u32 %v83, 7
    %v85 = vsub.s32 0, %v84
    %v86 = vrot.slane %v67, %v85
    %v87 = vlaneseq
    %v88 = vshrl.u32 %v87, 7
    %v89 = vsub.s32 0, %v88
    %v90 = vrot.slane %v68, %v89
    %v91 = vlaneseq
    %v92 = vshrl.u32 %v91, 7
    %v93 = vsub.s32 0, %v92
    %v94 = vrot.slane %v69, %v93
    %v95 = vlaneseq
    %v96 = vshrl.u32 %v95, 7
    %v97 = vsub.s32 0, %v96
    %v98 = vrot.slane %v70, %v97
    %v99 = vlaneseq
    %v100 = vshrl.u32 %v99, 7
    %v101 = vsub.s32 0, %v100
    %v102 = vrot.slane %v71, %v101
    %v103 = vlaneseq
    %v104 = vshrl.u32 %v103, 7
    %v105 = vsub.s32 0, %v104
    %v106 = vrot.slane %v72, %v105
    %v107 = vlaneseq
    %v108 = vshrl.u32 %v107, 7
    %v109 = vsub.s32 0, %v108
    %v110 = vrot.slane %v73, %v109
    %v111 = vlaneseq
    %v112 = vshrl.u32 %v111, 7
    %v113 = vsub.s32 0, %v112
    %v114 = vrot.slane %v74, %v113
    %vm123 = vcmask 261120
    %v125 = vsel %vm123, %v33, 0
    %127 = vmatprep.subr.mxu0 0.0
    %128 = vmatpush1.msra.mxu0 0.0
    %129 = vmatprep.subr.mxu0 0.0
    %130 = vmatpush1.msra.mxu0 0.0
    %131 = vmatprep.subr.mxu0 0.0
    %132 = vmatpush1.msra.mxu0 0.0
    %133 = vmatprep.subr.mxu0 0.0
    %134 = vmatpush1.msra.mxu0 0.0
    %135 = vmatprep.subr.mxu0 0.0
    %136 = vmatpush1.msra.mxu0 0.0
    %137 = vmatprep.subr.mxu0 0.0
    %138 = vmatpush1.msra.mxu0 0.0
    %139 = vmatprep.subr.mxu0 0.0
    %140 = vmatpush1.msra.mxu0 0.0
    %141 = vmatprep.subr.mxu0 0.0
    %142 = vmatpush1.msra.mxu0 0.0
    %143 = vmatprep.subr.mxu0 0.0
    %144 = vmatpush1.msra.mxu0 0.0
    %145 = vmatprep.subr.mxu0 0.0
    %146 = vmatpush1.msra.mxu0 0.0
    %147 = vmatprep.subr.mxu0 0.0
    %148 = vmatpush1.msra.mxu0 0.0
    %149 = vmatprep.subr.mxu0 0.0
    %150 = vmatpush1.msra.mxu0 0.0
    %151 = vmatprep.subr.mxu0 0.0
    %152 = vmatpush1.msra.mxu0 %v38
    %153 = vmatprep.subr.mxu0 0.0
    %154 = vmatpush1.msra.mxu0 %v37
    %155 = vmatprep.subr.mxu0 0.0
    %156 = vmatpush1.msra.mxu0 %v36
    %157 = vmatprep.subr.mxu0 0.0
    %158 = vmatpush1.msra.mxu0 %v35
    %159 = vmatprep.subr.mxu0 0.0
    %160 = vmatpush2.msra.mxu0 0.0
    %161 = vmatprep.subr.mxu0 0.0
    %162 = vmatpush2.msra.mxu0 0.0
    %163 = vmatprep.subr.mxu0 0.0
    %164 = vmatpush2.msra.mxu0 0.0
    %165 = vmatprep.subr.mxu0 0.0
    %166 = vmatpush2.msra.mxu0 0.0
    %167 = vmatprep.subr.mxu0 0.0
    %168 = vmatpush2.msra.mxu0 0.0
    %169 = vmatprep.subr.mxu0 0.0
    %170 = vmatpush2.msra.mxu0 0.0
    %171 = vmatprep.subr.mxu0 0.0
    %172 = vmatpush2.msra.mxu0 0.0
    %173 = vmatprep.subr.mxu0 0.0
    %174 = vmatpush2.msra.mxu0 0.0
    %175 = vmatprep.subr.mxu0 0.0
    %176 = vmatpush2.msra.mxu0 0.0
    %177 = vmatprep.subr.mxu0 0.0
    %178 = vmatpush2.msra.mxu0 0.0
    %179 = vmatprep.subr.mxu0 0.0
    %180 = vmatpush2.msra.mxu0 0.0
    %181 = vmatprep.subr.mxu0 0.0
    %182 = vmatpush2.msra.mxu0 0.0
    %183 = vmatprep.subr.mxu0 0.0
    %184 = vmatpush2.msra.mxu0 0.0
    %185 = vmatprep.subr.mxu0 0.0
    %186 = vmatpush2.msra.mxu0 0.0
    %187 = vmatprep.subr.mxu0 0.0
    %188 = vmatpush2.msra.mxu0 0.0
    %189 = vmatprep.subr.mxu0 0.0
    %190 = vmatpush2.msra.mxu0 0.0
    %191 = vmatprep.mubr.f32.mxu0 0.0
    %192 = vmatmul.mubr.f32.gmra.mxu0 %v125
    %v193 = vpop.f32.mrf.mxu0
    %v194 = vadd.f32 %v86, %v193
    %v195 = vpop.f32.mrf.mxu0
    %196 = vdwg.mxu0
    %197 = vmatprep.subr.mxu0 0.0
    %198 = vmatpush1.msra.mxu0 0.0
    %199 = vmatprep.subr.mxu0 0.0
    %200 = vmatpush1.msra.mxu0 0.0
    %201 = vmatprep.subr.mxu0 0.0
    %202 = vmatpush1.msra.mxu0 0.0
    %203 = vmatprep.subr.mxu0 0.0
    %204 = vmatpush1.msra.mxu0 0.0
    %205 = vmatprep.subr.mxu0 0.0
    %206 = vmatpush1.msra.mxu0 0.0
    %207 = vmatprep.subr.mxu0 0.0
    %208 = vmatpush1.msra.mxu0 0.0
    %209 = vmatprep.subr.mxu0 0.0
    %210 = vmatpush1.msra.mxu0 0.0
    %211 = vmatprep.subr.mxu0 0.0
    %212 = vmatpush1.msra.mxu0 0.0
    %213 = vmatprep.subr.mxu0 0.0
    %214 = vmatpush1.msra.mxu0 0.0
    %215 = vmatprep.subr.mxu0 0.0
    %216 = vmatpush1.msra.mxu0 0.0
    %217 = vmatprep.subr.mxu0 0.0
    %218 = vmatpush1.msra.mxu0 0.0
    %219 = vmatprep.subr.mxu0 0.0
    %220 = vmatpush1.msra.mxu0 0.0
    %221 = vmatprep.subr.mxu0 0.0
    %222 = vmatpush1.msra.mxu0 %v42
    %223 = vmatprep.subr.mxu0 0.0
    %224 = vmatpush1.msra.mxu0 %v41
    %225 = vmatprep.subr.mxu0 0.0
    %226 = vmatpush1.msra.mxu0 %v40
    %227 = vmatprep.subr.mxu0 0.0
    %228 = vmatpush1.msra.mxu0 %v39
    %229 = vmatprep.subr.mxu0 0.0
    %230 = vmatpush2.msra.mxu0 0.0
    %231 = vmatprep.subr.mxu0 0.0
    %232 = vmatpush2.msra.mxu0 0.0
    %233 = vmatprep.subr.mxu0 0.0
    %234 = vmatpush2.msra.mxu0 0.0
    %235 = vmatprep.subr.mxu0 0.0
    %236 = vmatpush2.msra.mxu0 0.0
    %237 = vmatprep.subr.mxu0 0.0
    %238 = vmatpush2.msra.mxu0 0.0
    %239 = vmatprep.subr.mxu0 0.0
    %240 = vmatpush2.msra.mxu0 0.0
    %241 = vmatprep.subr.mxu0 0.0
    %242 = vmatpush2.msra.mxu0 0.0
    %243 = vmatprep.subr.mxu0 0.0
    %244 = vmatpush2.msra.mxu0 0.0
    %245 = vmatprep.subr.mxu0 0.0
    %246 = vmatpush2.msra.mxu0 0.0
    %247 = vmatprep.subr.mxu0 0.0
    %248 = vmatpush2.msra.mxu0 0.0
    %249 = vmatprep.subr.mxu0 0.0
    %250 = vmatpush2.msra.mxu0 0.0
    %251 = vmatprep.subr.mxu0 0.0
    %252 = vmatpush2.msra.mxu0 0.0
    %253 = vmatprep.subr.mxu0 0.0
    %254 = vmatpush2.msra.mxu0 0.0
    %255 = vmatprep.subr.mxu0 0.0
    %256 = vmatpush2.msra.mxu0 0.0
    %257 = vmatprep.subr.mxu0 0.0
    %258 = vmatpush2.msra.mxu0 0.0
    %259 = vmatprep.subr.mxu0 0.0
    %260 = vmatpush2.msra.mxu0 0.0
    %261 = vmatprep.mubr.f32.mxu0 0.0
    %262 = vmatmul.mubr.f32.gmra.mxu0 %v125
    %v263 = vpop.f32.mrf.mxu0
    %v264 = vadd.f32 %v90, %v263
    %v265 = vpop.f32.mrf.mxu0
    %266 = vdwg.mxu0
    %267 = vmatprep.subr.mxu0 0.0
    %268 = vmatpush1.msra.mxu0 0.0
    %269 = vmatprep.subr.mxu0 0.0
    %270 = vmatpush1.msra.mxu0 0.0
    %271 = vmatprep.subr.mxu0 0.0
    %272 = vmatpush1.msra.mxu0 0.0
    %273 = vmatprep.subr.mxu0 0.0
    %274 = vmatpush1.msra.mxu0 0.0
    %275 = vmatprep.subr.mxu0 0.0
    %276 = vmatpush1.msra.mxu0 0.0
    %277 = vmatprep.subr.mxu0 0.0
    %278 = vmatpush1.msra.mxu0 0.0
    %279 = vmatprep.subr.mxu0 0.0
    %280 = vmatpush1.msra.mxu0 0.0
    %281 = vmatprep.subr.mxu0 0.0
    %282 = vmatpush1.msra.mxu0 0.0
    %283 = vmatprep.subr.mxu0 0.0
    %284 = vmatpush1.msra.mxu0 0.0
    %285 = vmatprep.subr.mxu0 0.0
    %286 = vmatpush1.msra.mxu0 0.0
    %287 = vmatprep.subr.mxu0 0.0
    %288 = vmatpush1.msra.mxu0 0.0
    %289 = vmatprep.subr.mxu0 0.0
    %290 = vmatpush1.msra.mxu0 0.0
    %291 = vmatprep.subr.mxu0 0.0
    %292 = vmatpush1.msra.mxu0 %v46
    %293 = vmatprep.subr.mxu0 0.0
    %294 = vmatpush1.msra.mxu0 %v45
    %295 = vmatprep.subr.mxu0 0.0
    %296 = vmatpush1.msra.mxu0 %v44
    %297 = vmatprep.subr.mxu0 0.0
    %298 = vmatpush1.msra.mxu0 %v43
    %299 = vmatprep.subr.mxu0 0.0
    %300 = vmatpush2.msra.mxu0 0.0
    %301 = vmatprep.subr.mxu0 0.0
    %302 = vmatpush2.msra.mxu0 0.0
    %303 = vmatprep.subr.mxu0 0.0
    %304 = vmatpush2.msra.mxu0 0.0
    %305 = vmatprep.subr.mxu0 0.0
    %306 = vmatpush2.msra.mxu0 0.0
    %307 = vmatprep.subr.mxu0 0.0
    %308 = vmatpush2.msra.mxu0 0.0
    %309 = vmatprep.subr.mxu0 0.0
    %310 = vmatpush2.msra.mxu0 0.0
    %311 = vmatprep.subr.mxu0 0.0
    %312 = vmatpush2.msra.mxu0 0.0
    %313 = vmatprep.subr.mxu0 0.0
    %314 = vmatpush2.msra.mxu0 0.0
    %315 = vmatprep.subr.mxu0 0.0
    %316 = vmatpush2.msra.mxu0 0.0
    %317 = vmatprep.subr.mxu0 0.0
    %318 = vmatpush2.msra.mxu0 0.0
    %319 = vmatprep.subr.mxu0 0.0
    %320 = vmatpush2.msra.mxu0 0.0
    %321 = vmatprep.subr.mxu0 0.0
    %322 = vmatpush2.msra.mxu0 0.0
    %323 = vmatprep.subr.mxu0 0.0
    %324 = vmatpush2.msra.mxu0 0.0
    %325 = vmatprep.subr.mxu0 0.0
    %326 = vmatpush2.msra.mxu0 0.0
    %327 = vmatprep.subr.mxu0 0.0
    %328 = vmatpush2.msra.mxu0 0.0
    %329 = vmatprep.subr.mxu0 0.0
    %330 = vmatpush2.msra.mxu0 0.0
    %331 = vmatprep.mubr.f32.mxu0 0.0
    %332 = vmatmul.mubr.f32.gmra.mxu0 %v125
    %v333 = vpop.f32.mrf.mxu0
    %v334 = vadd.f32 %v94, %v333
    %v335 = vpop.f32.mrf.mxu0
    %336 = vdwg.mxu0
    %337 = vmatprep.subr.mxu0 0.0
    %338 = vmatpush1.msra.mxu0 0.0
    %339 = vmatprep.subr.mxu0 0.0
    %340 = vmatpush1.msra.mxu0 0.0
    %341 = vmatprep.subr.mxu0 0.0
    %342 = vmatpush1.msra.mxu0 0.0
    %343 = vmatprep.subr.mxu0 0.0
    %344 = vmatpush1.msra.mxu0 0.0
    %345 = vmatprep.subr.mxu0 0.0
    %346 = vmatpush1.msra.mxu0 0.0
    %347 = vmatprep.subr.mxu0 0.0
    %348 = vmatpush1.msra.mxu0 0.0
    %349 = vmatprep.subr.mxu0 0.0
    %350 = vmatpush1.msra.mxu0 0.0
    %351 = vmatprep.subr.mxu0 0.0
    %352 = vmatpush1.msra.mxu0 0.0
    %353 = vmatprep.subr.mxu0 0.0
    %354 = vmatpush1.msra.mxu0 0.0
    %355 = vmatprep.subr.mxu0 0.0
    %356 = vmatpush1.msra.mxu0 0.0
    %357 = vmatprep.subr.mxu0 0.0
    %358 = vmatpush1.msra.mxu0 0.0
    %359 = vmatprep.subr.mxu0 0.0
    %360 = vmatpush1.msra.mxu0 0.0
    %361 = vmatprep.subr.mxu0 0.0
    %362 = vmatpush1.msra.mxu0 %v50
    %363 = vmatprep.subr.mxu0 0.0
    %364 = vmatpush1.msra.mxu0 %v49
    %365 = vmatprep.subr.mxu0 0.0
    %366 = vmatpush1.msra.mxu0 %v48
    %367 = vmatprep.subr.mxu0 0.0
    %368 = vmatpush1.msra.mxu0 %v47
    %369 = vmatprep.subr.mxu0 0.0
    %370 = vmatpush2.msra.mxu0 0.0
    %371 = vmatprep.subr.mxu0 0.0
    %372 = vmatpush2.msra.mxu0 0.0
    %373 = vmatprep.subr.mxu0 0.0
    %374 = vmatpush2.msra.mxu0 0.0
    %375 = vmatprep.subr.mxu0 0.0
    %376 = vmatpush2.msra.mxu0 0.0
    %377 = vmatprep.subr.mxu0 0.0
    %378 = vmatpush2.msra.mxu0 0.0
    %379 = vmatprep.subr.mxu0 0.0
    %380 = vmatpush2.msra.mxu0 0.0
    %381 = vmatprep.subr.mxu0 0.0
    %382 = vmatpush2.msra.mxu0 0.0
    %383 = vmatprep.subr.mxu0 0.0
    %384 = vmatpush2.msra.mxu0 0.0
    %385 = vmatprep.subr.mxu0 0.0
    %386 = vmatpush2.msra.mxu0 0.0
    %387 = vmatprep.subr.mxu0 0.0
    %388 = vmatpush2.msra.mxu0 0.0
    %389 = vmatprep.subr.mxu0 0.0
    %390 = vmatpush2.msra.mxu0 0.0
    %391 = vmatprep.subr.mxu0 0.0
    %392 = vmatpush2.msra.mxu0 0.0
    %393 = vmatprep.subr.mxu0 0.0
    %394 = vmatpush2.msra.mxu0 0.0
    %395 = vmatprep.subr.mxu0 0.0
    %396 = vmatpush2.msra.mxu0 0.0
    %397 = vmatprep.subr.mxu0 0.0
    %398 = vmatpush2.msra.mxu0 0.0
    %399 = vmatprep.subr.mxu0 0.0
    %400 = vmatpush2.msra.mxu0 0.0
    %401 = vmatprep.mubr.f32.mxu0 0.0
    %402 = vmatmul.mubr.f32.gmra.mxu0 %v125
    %v403 = vpop.f32.mrf.mxu0
    %v404 = vadd.f32 %v98, %v403
    %v405 = vpop.f32.mrf.mxu0
    %406 = vdwg.mxu0
    %v408 = vsel %vm123, %v34, 0
    %410 = vmatprep.subr.mxu0 0.0
    %411 = vmatpush1.msra.mxu0 0.0
    %412 = vmatprep.subr.mxu0 0.0
    %413 = vmatpush1.msra.mxu0 0.0
    %414 = vmatprep.subr.mxu0 0.0
    %415 = vmatpush1.msra.mxu0 0.0
    %416 = vmatprep.subr.mxu0 0.0
    %417 = vmatpush1.msra.mxu0 0.0
    %418 = vmatprep.subr.mxu0 0.0
    %419 = vmatpush1.msra.mxu0 0.0
    %420 = vmatprep.subr.mxu0 0.0
    %421 = vmatpush1.msra.mxu0 0.0
    %422 = vmatprep.subr.mxu0 0.0
    %423 = vmatpush1.msra.mxu0 0.0
    %424 = vmatprep.subr.mxu0 0.0
    %425 = vmatpush1.msra.mxu0 0.0
    %426 = vmatprep.subr.mxu0 0.0
    %427 = vmatpush1.msra.mxu0 0.0
    %428 = vmatprep.subr.mxu0 0.0
    %429 = vmatpush1.msra.mxu0 0.0
    %430 = vmatprep.subr.mxu0 0.0
    %431 = vmatpush1.msra.mxu0 0.0
    %432 = vmatprep.subr.mxu0 0.0
    %433 = vmatpush1.msra.mxu0 0.0
    %434 = vmatprep.subr.mxu0 0.0
    %435 = vmatpush1.msra.mxu0 %v54
    %436 = vmatprep.subr.mxu0 0.0
    %437 = vmatpush1.msra.mxu0 %v53
    %438 = vmatprep.subr.mxu0 0.0
    %439 = vmatpush1.msra.mxu0 %v52
    %440 = vmatprep.subr.mxu0 0.0
    %441 = vmatpush1.msra.mxu0 %v51
    %442 = vmatprep.subr.mxu0 0.0
    %443 = vmatpush2.msra.mxu0 0.0
    %444 = vmatprep.subr.mxu0 0.0
    %445 = vmatpush2.msra.mxu0 0.0
    %446 = vmatprep.subr.mxu0 0.0
    %447 = vmatpush2.msra.mxu0 0.0
    %448 = vmatprep.subr.mxu0 0.0
    %449 = vmatpush2.msra.mxu0 0.0
    %450 = vmatprep.subr.mxu0 0.0
    %451 = vmatpush2.msra.mxu0 0.0
    %452 = vmatprep.subr.mxu0 0.0
    %453 = vmatpush2.msra.mxu0 0.0
    %454 = vmatprep.subr.mxu0 0.0
    %455 = vmatpush2.msra.mxu0 0.0
    %456 = vmatprep.subr.mxu0 0.0
    %457 = vmatpush2.msra.mxu0 0.0
    %458 = vmatprep.subr.mxu0 0.0
    %459 = vmatpush2.msra.mxu0 0.0
    %460 = vmatprep.subr.mxu0 0.0
    %461 = vmatpush2.msra.mxu0 0.0
    %462 = vmatprep.subr.mxu0 0.0
    %463 = vmatpush2.msra.mxu0 0.0
    %464 = vmatprep.subr.mxu0 0.0
    %465 = vmatpush2.msra.mxu0 0.0
    %466 = vmatprep.subr.mxu0 0.0
    %467 = vmatpush2.msra.mxu0 0.0
    %468 = vmatprep.subr.mxu0 0.0
    %469 = vmatpush2.msra.mxu0 0.0
    %470 = vmatprep.subr.mxu0 0.0
    %471 = vmatpush2.msra.mxu0 0.0
    %472 = vmatprep.subr.mxu0 0.0
    %473 = vmatpush2.msra.mxu0 0.0
    %474 = vmatprep.mubr.f32.mxu0 0.0
    %475 = vmatmul.mubr.f32.gmra.mxu0 %v408
    %v476 = vpop.f32.mrf.mxu0
    %v477 = vadd.f32 %v102, %v476
    %v478 = vpop.f32.mrf.mxu0
    %479 = vdwg.mxu0
    %480 = vmatprep.subr.mxu0 0.0
    %481 = vmatpush1.msra.mxu0 0.0
    %482 = vmatprep.subr.mxu0 0.0
    %483 = vmatpush1.msra.mxu0 0.0
    %484 = vmatprep.subr.mxu0 0.0
    %485 = vmatpush1.msra.mxu0 0.0
    %486 = vmatprep.subr.mxu0 0.0
    %487 = vmatpush1.msra.mxu0 0.0
    %488 = vmatprep.subr.mxu0 0.0
    %489 = vmatpush1.msra.mxu0 0.0
    %490 = vmatprep.subr.mxu0 0.0
    %491 = vmatpush1.msra.mxu0 0.0
    %492 = vmatprep.subr.mxu0 0.0
    %493 = vmatpush1.msra.mxu0 0.0
    %494 = vmatprep.subr.mxu0 0.0
    %495 = vmatpush1.msra.mxu0 0.0
    %496 = vmatprep.subr.mxu0 0.0
    %497 = vmatpush1.msra.mxu0 0.0
    %498 = vmatprep.subr.mxu0 0.0
    %499 = vmatpush1.msra.mxu0 0.0
    %500 = vmatprep.subr.mxu0 0.0
    %501 = vmatpush1.msra.mxu0 0.0
    %502 = vmatprep.subr.mxu0 0.0
    %503 = vmatpush1.msra.mxu0 0.0
    %504 = vmatprep.subr.mxu0 0.0
    %505 = vmatpush1.msra.mxu0 %v58
    %506 = vmatprep.subr.mxu0 0.0
    %507 = vmatpush1.msra.mxu0 %v57
    %508 = vmatprep.subr.mxu0 0.0
    %509 = vmatpush1.msra.mxu0 %v56
    %510 = vmatprep.subr.mxu0 0.0
    %511 = vmatpush1.msra.mxu0 %v55
    %512 = vmatprep.subr.mxu0 0.0
    %513 = vmatpush2.msra.mxu0 0.0
    %514 = vmatprep.subr.mxu0 0.0
    %515 = vmatpush2.msra.mxu0 0.0
    %516 = vmatprep.subr.mxu0 0.0
    %517 = vmatpush2.msra.mxu0 0.0
    %518 = vmatprep.subr.mxu0 0.0
    %519 = vmatpush2.msra.mxu0 0.0
    %520 = vmatprep.subr.mxu0 0.0
    %521 = vmatpush2.msra.mxu0 0.0
    %522 = vmatprep.subr.mxu0 0.0
    %523 = vmatpush2.msra.mxu0 0.0
    %524 = vmatprep.subr.mxu0 0.0
    %525 = vmatpush2.msra.mxu0 0.0
    %526 = vmatprep.subr.mxu0 0.0
    %527 = vmatpush2.msra.mxu0 0.0
    %528 = vmatprep.subr.mxu0 0.0
    %529 = vmatpush2.msra.mxu0 0.0
    %530 = vmatprep.subr.mxu0 0.0
    %531 = vmatpush2.msra.mxu0 0.0
    %532 = vmatprep.subr.mxu0 0.0
    %533 = vmatpush2.msra.mxu0 0.0
    %534 = vmatprep.subr.mxu0 0.0
    %535 = vmatpush2.msra.mxu0 0.0
    %536 = vmatprep.subr.mxu0 0.0
    %537 = vmatpush2.msra.mxu0 0.0
    %538 = vmatprep.subr.mxu0 0.0
    %539 = vmatpush2.msra.mxu0 0.0
    %540 = vmatprep.subr.mxu0 0.0
    %541 = vmatpush2.msra.mxu0 0.0
    %542 = vmatprep.subr.mxu0 0.0
    %543 = vmatpush2.msra.mxu0 0.0
    %544 = vmatprep.mubr.f32.mxu0 0.0
    %545 = vmatmul.mubr.f32.gmra.mxu0 %v408
    %v546 = vpop.f32.mrf.mxu0
    %v547 = vadd.f32 %v106, %v546
    %v548 = vpop.f32.mrf.mxu0
    %549 = vdwg.mxu0
    %550 = vmatprep.subr.mxu0 0.0
    %551 = vmatpush1.msra.mxu0 0.0
    %552 = vmatprep.subr.mxu0 0.0
    %553 = vmatpush1.msra.mxu0 0.0
    %554 = vmatprep.subr.mxu0 0.0
    %555 = vmatpush1.msra.mxu0 0.0
    %556 = vmatprep.subr.mxu0 0.0
    %557 = vmatpush1.msra.mxu0 0.0
    %558 = vmatprep.subr.mxu0 0.0
    %559 = vmatpush1.msra.mxu0 0.0
    %560 = vmatprep.subr.mxu0 0.0
    %561 = vmatpush1.msra.mxu0 0.0
    %562 = vmatprep.subr.mxu0 0.0
    %563 = vmatpush1.msra.mxu0 0.0
    %564 = vmatprep.subr.mxu0 0.0
    %565 = vmatpush1.msra.mxu0 0.0
    %566 = vmatprep.subr.mxu0 0.0
    %567 = vmatpush1.msra.mxu0 0.0
    %568 = vmatprep.subr.mxu0 0.0
    %569 = vmatpush1.msra.mxu0 0.0
    %570 = vmatprep.subr.mxu0 0.0
    %571 = vmatpush1.msra.mxu0 0.0
    %572 = vmatprep.subr.mxu0 0.0
    %573 = vmatpush1.msra.mxu0 0.0
    %574 = vmatprep.subr.mxu0 0.0
    %575 = vmatpush1.msra.mxu0 %v62
    %576 = vmatprep.subr.mxu0 0.0
    %577 = vmatpush1.msra.mxu0 %v61
    %578 = vmatprep.subr.mxu0 0.0
    %579 = vmatpush1.msra.mxu0 %v60
    %580 = vmatprep.subr.mxu0 0.0
    %581 = vmatpush1.msra.mxu0 %v59
    %582 = vmatprep.subr.mxu0 0.0
    %583 = vmatpush2.msra.mxu0 0.0
    %584 = vmatprep.subr.mxu0 0.0
    %585 = vmatpush2.msra.mxu0 0.0
    %586 = vmatprep.subr.mxu0 0.0
    %587 = vmatpush2.msra.mxu0 0.0
    %588 = vmatprep.subr.mxu0 0.0
    %589 = vmatpush2.msra.mxu0 0.0
    %590 = vmatprep.subr.mxu0 0.0
    %591 = vmatpush2.msra.mxu0 0.0
    %592 = vmatprep.subr.mxu0 0.0
    %593 = vmatpush2.msra.mxu0 0.0
    %594 = vmatprep.subr.mxu0 0.0
    %595 = vmatpush2.msra.mxu0 0.0
    %596 = vmatprep.subr.mxu0 0.0
    %597 = vmatpush2.msra.mxu0 0.0
    %598 = vmatprep.subr.mxu0 0.0
    %599 = vmatpush2.msra.mxu0 0.0
    %600 = vmatprep.subr.mxu0 0.0
    %601 = vmatpush2.msra.mxu0 0.0
    %602 = vmatprep.subr.mxu0 0.0
    %603 = vmatpush2.msra.mxu0 0.0
    %604 = vmatprep.subr.mxu0 0.0
    %605 = vmatpush2.msra.mxu0 0.0
    %606 = vmatprep.subr.mxu0 0.0
    %607 = vmatpush2.msra.mxu0 0.0
    %608 = vmatprep.subr.mxu0 0.0
    %609 = vmatpush2.msra.mxu0 0.0
    %610 = vmatprep.subr.mxu0 0.0
    %611 = vmatpush2.msra.mxu0 0.0
    %612 = vmatprep.subr.mxu0 0.0
    %613 = vmatpush2.msra.mxu0 0.0
    %614 = vmatprep.mubr.f32.mxu0 0.0
    %615 = vmatmul.mubr.f32.gmra.mxu0 %v408
    %v616 = vpop.f32.mrf.mxu0
    %v617 = vadd.f32 %v110, %v616
    %v618 = vpop.f32.mrf.mxu0
    %619 = vdwg.mxu0
    %620 = vmatprep.subr.mxu0 0.0
    %621 = vmatpush1.msra.mxu0 0.0
    %622 = vmatprep.subr.mxu0 0.0
    %623 = vmatpush1.msra.mxu0 0.0
    %624 = vmatprep.subr.mxu0 0.0
    %625 = vmatpush1.msra.mxu0 0.0
    %626 = vmatprep.subr.mxu0 0.0
    %627 = vmatpush1.msra.mxu0 0.0
    %628 = vmatprep.subr.mxu0 0.0
    %629 = vmatpush1.msra.mxu0 0.0
    %630 = vmatprep.subr.mxu0 0.0
    %631 = vmatpush1.msra.mxu0 0.0
    %632 = vmatprep.subr.mxu0 0.0
    %633 = vmatpush1.msra.mxu0 0.0
    %634 = vmatprep.subr.mxu0 0.0
    %635 = vmatpush1.msra.mxu0 0.0
    %636 = vmatprep.subr.mxu0 0.0
    %637 = vmatpush1.msra.mxu0 0.0
    %638 = vmatprep.subr.mxu0 0.0
    %639 = vmatpush1.msra.mxu0 0.0
    %640 = vmatprep.subr.mxu0 0.0
    %641 = vmatpush1.msra.mxu0 0.0
    %642 = vmatprep.subr.mxu0 0.0
    %643 = vmatpush1.msra.mxu0 0.0
    %644 = vmatprep.subr.mxu0 0.0
    %645 = vmatpush1.msra.mxu0 %v66
    %646 = vmatprep.subr.mxu0 0.0
    %647 = vmatpush1.msra.mxu0 %v65
    %648 = vmatprep.subr.mxu0 0.0
    %649 = vmatpush1.msra.mxu0 %v64
    %650 = vmatprep.subr.mxu0 0.0
    %651 = vmatpush1.msra.mxu0 %v63
    %652 = vmatprep.subr.mxu0 0.0
    %653 = vmatpush2.msra.mxu0 0.0
    %654 = vmatprep.subr.mxu0 0.0
    %655 = vmatpush2.msra.mxu0 0.0
    %656 = vmatprep.subr.mxu0 0.0
    %657 = vmatpush2.msra.mxu0 0.0
    %658 = vmatprep.subr.mxu0 0.0
    %659 = vmatpush2.msra.mxu0 0.0
    %660 = vmatprep.subr.mxu0 0.0
    %661 = vmatpush2.msra.mxu0 0.0
    %662 = vmatprep.subr.mxu0 0.0
    %663 = vmatpush2.msra.mxu0 0.0
    %664 = vmatprep.subr.mxu0 0.0
    %665 = vmatpush2.msra.mxu0 0.0
    %666 = vmatprep.subr.mxu0 0.0
    %667 = vmatpush2.msra.mxu0 0.0
    %668 = vmatprep.subr.mxu0 0.0
    %669 = vmatpush2.msra.mxu0 0.0
    %670 = vmatprep.subr.mxu0 0.0
    %671 = vmatpush2.msra.mxu0 0.0
    %672 = vmatprep.subr.mxu0 0.0
    %673 = vmatpush2.msra.mxu0 0.0
    %674 = vmatprep.subr.mxu0 0.0
    %675 = vmatpush2.msra.mxu0 0.0
    %676 = vmatprep.subr.mxu0 0.0
    %677 = vmatpush2.msra.mxu0 0.0
    %678 = vmatprep.subr.mxu0 0.0
    %679 = vmatpush2.msra.mxu0 0.0
    %680 = vmatprep.subr.mxu0 0.0
    %681 = vmatpush2.msra.mxu0 0.0
    %682 = vmatprep.subr.mxu0 0.0
    %683 = vmatpush2.msra.mxu0 0.0
    %684 = vmatprep.mubr.f32.mxu0 0.0
    %685 = vmatmul.mubr.f32.gmra.mxu0 %v408
    %v686 = vpop.f32.mrf.mxu0
    %v687 = vadd.f32 %v114, %v686
    %v688 = vpop.f32.mrf.mxu0
    %689 = vdwg.mxu0
    %vm690 = vcmask 64512
    %v692 = vsel %vm690, %v194, 0
    %694 = vmatprep.subr.mxu0 0.0
    %695 = vmatpush1.xpose.msra.mxu0 0.0
    %696 = vmatprep.subr.mxu0 0.0
    %697 = vmatpush1.xpose.msra.mxu0 0.0
    %698 = vmatprep.subr.mxu0 0.0
    %699 = vmatpush1.xpose.msra.mxu0 0.0
    %700 = vmatprep.subr.mxu0 0.0
    %701 = vmatpush1.xpose.msra.mxu0 0.0
    %702 = vmatprep.subr.mxu0 0.0
    %703 = vmatpush1.xpose.msra.mxu0 0.0
    %704 = vmatprep.subr.mxu0 0.0
    %705 = vmatpush1.xpose.msra.mxu0 0.0
    %706 = vmatprep.subr.mxu0 0.0
    %707 = vmatpush1.xpose.msra.mxu0 0.0
    %708 = vmatprep.subr.mxu0 0.0
    %709 = vmatpush1.xpose.msra.mxu0 0.0
    %710 = vmatprep.subr.mxu0 0.0
    %711 = vmatpush1.xpose.msra.mxu0 0.0
    %712 = vmatprep.subr.mxu0 0.0
    %713 = vmatpush1.xpose.msra.mxu0 0.0
    %714 = vmatprep.subr.mxu0 0.0
    %715 = vmatpush1.xpose.msra.mxu0 0.0
    %716 = vmatprep.subr.mxu0 0.0
    %717 = vmatpush1.xpose.msra.mxu0 0.0
    %718 = vmatprep.subr.mxu0 0.0
    %719 = vmatpush1.xpose.msra.mxu0 0.0
    %720 = vmatprep.subr.mxu0 0.0
    %721 = vmatpush1.xpose.msra.mxu0 0.0
    %722 = vmatprep.subr.mxu0 0.0
    %723 = vmatpush1.xpose.msra.mxu0 0.0
    %724 = vmatprep.subr.mxu0 0.0
    %725 = vmatpush1.xpose.msra.mxu0 %v692
    %726 = vmatprep.subr.mxu0 0.0
    %727 = vmatpush2.xpose.msra.mxu0 0.0
    %728 = vmatprep.subr.mxu0 0.0
    %729 = vmatpush2.xpose.msra.mxu0 0.0
    %730 = vmatprep.subr.mxu0 0.0
    %731 = vmatpush2.xpose.msra.mxu0 0.0
    %732 = vmatprep.subr.mxu0 0.0
    %733 = vmatpush2.xpose.msra.mxu0 0.0
    %734 = vmatprep.subr.mxu0 0.0
    %735 = vmatpush2.xpose.msra.mxu0 0.0
    %736 = vmatprep.subr.mxu0 0.0
    %737 = vmatpush2.xpose.msra.mxu0 0.0
    %738 = vmatprep.subr.mxu0 0.0
    %739 = vmatpush2.xpose.msra.mxu0 0.0
    %740 = vmatprep.subr.mxu0 0.0
    %741 = vmatpush2.xpose.msra.mxu0 0.0
    %742 = vmatprep.subr.mxu0 0.0
    %743 = vmatpush2.xpose.msra.mxu0 0.0
    %744 = vmatprep.subr.mxu0 0.0
    %745 = vmatpush2.xpose.msra.mxu0 0.0
    %746 = vmatprep.subr.mxu0 0.0
    %747 = vmatpush2.xpose.msra.mxu0 0.0
    %748 = vmatprep.subr.mxu0 0.0
    %749 = vmatpush2.xpose.msra.mxu0 0.0
    %750 = vmatprep.subr.mxu0 0.0
    %751 = vmatpush2.xpose.msra.mxu0 0.0
    %752 = vmatprep.subr.mxu0 0.0
    %753 = vmatpush2.xpose.msra.mxu0 0.0
    %754 = vmatprep.subr.mxu0 0.0
    %755 = vmatpush2.xpose.msra.mxu0 0.0
    %756 = vmatprep.subr.mxu0 0.0
    %757 = vmatpush2.xpose.msra.mxu0 0.0
    %758 = vmatprep.mubr.f32.mxu0 0.0
    %759 = vmatmul.mubr.f32.gmra.mxu0 %v692
    %v760 = vpop.f32.mrf.mxu0
    %v761 = vadd.f32 0.0, %v760
    %v762 = vpop.f32.mrf.mxu0
    %763 = vdwg.mxu0
    %v765 = vsel %vm690, %v264, 0
    %767 = vmatprep.subr.mxu0 0.0
    %768 = vmatpush1.xpose.msra.mxu0 0.0
    %769 = vmatprep.subr.mxu0 0.0
    %770 = vmatpush1.xpose.msra.mxu0 0.0
    %771 = vmatprep.subr.mxu0 0.0
    %772 = vmatpush1.xpose.msra.mxu0 0.0
    %773 = vmatprep.subr.mxu0 0.0
    %774 = vmatpush1.xpose.msra.mxu0 0.0
    %775 = vmatprep.subr.mxu0 0.0
    %776 = vmatpush1.xpose.msra.mxu0 0.0
    %777 = vmatprep.subr.mxu0 0.0
    %778 = vmatpush1.xpose.msra.mxu0 0.0
    %779 = vmatprep.subr.mxu0 0.0
    %780 = vmatpush1.xpose.msra.mxu0 0.0
    %781 = vmatprep.subr.mxu0 0.0
    %782 = vmatpush1.xpose.msra.mxu0 0.0
    %783 = vmatprep.subr.mxu0 0.0
    %784 = vmatpush1.xpose.msra.mxu0 0.0
    %785 = vmatprep.subr.mxu0 0.0
    %786 = vmatpush1.xpose.msra.mxu0 0.0
    %787 = vmatprep.subr.mxu0 0.0
    %788 = vmatpush1.xpose.msra.mxu0 0.0
    %789 = vmatprep.subr.mxu0 0.0
    %790 = vmatpush1.xpose.msra.mxu0 0.0
    %791 = vmatprep.subr.mxu0 0.0
    %792 = vmatpush1.xpose.msra.mxu0 0.0
    %793 = vmatprep.subr.mxu0 0.0
    %794 = vmatpush1.xpose.msra.mxu0 0.0
    %795 = vmatprep.subr.mxu0 0.0
    %796 = vmatpush1.xpose.msra.mxu0 0.0
    %797 = vmatprep.subr.mxu0 0.0
    %798 = vmatpush1.xpose.msra.mxu0 %v765
    %799 = vmatprep.subr.mxu0 0.0
    %800 = vmatpush2.xpose.msra.mxu0 0.0
    %801 = vmatprep.subr.mxu0 0.0
    %802 = vmatpush2.xpose.msra.mxu0 0.0
    %803 = vmatprep.subr.mxu0 0.0
    %804 = vmatpush2.xpose.msra.mxu0 0.0
    %805 = vmatprep.subr.mxu0 0.0
    %806 = vmatpush2.xpose.msra.mxu0 0.0
    %807 = vmatprep.subr.mxu0 0.0
    %808 = vmatpush2.xpose.msra.mxu0 0.0
    %809 = vmatprep.subr.mxu0 0.0
    %810 = vmatpush2.xpose.msra.mxu0 0.0
    %811 = vmatprep.subr.mxu0 0.0
    %812 = vmatpush2.xpose.msra.mxu0 0.0
    %813 = vmatprep.subr.mxu0 0.0
    %814 = vmatpush2.xpose.msra.mxu0 0.0
    %815 = vmatprep.subr.mxu0 0.0
    %816 = vmatpush2.xpose.msra.mxu0 0.0
    %817 = vmatprep.subr.mxu0 0.0
    %818 = vmatpush2.xpose.msra.mxu0 0.0
    %819 = vmatprep.subr.mxu0 0.0
    %820 = vmatpush2.xpose.msra.mxu0 0.0
    %821 = vmatprep.subr.mxu0 0.0
    %822 = vmatpush2.xpose.msra.mxu0 0.0
    %823 = vmatprep.subr.mxu0 0.0
    %824 = vmatpush2.xpose.msra.mxu0 0.0
    %825 = vmatprep.subr.mxu0 0.0
    %826 = vmatpush2.xpose.msra.mxu0 0.0
    %827 = vmatprep.subr.mxu0 0.0
    %828 = vmatpush2.xpose.msra.mxu0 0.0
    %829 = vmatprep.subr.mxu0 0.0
    %830 = vmatpush2.xpose.msra.mxu0 0.0
    %831 = vmatprep.mubr.f32.mxu0 0.0
    %832 = vmatmul.mubr.f32.gmra.mxu0 %v765
    %v833 = vpop.f32.mrf.mxu0
    %v834 = vadd.f32 0.0, %v833
    %v835 = vpop.f32.mrf.mxu0
    %836 = vdwg.mxu0
    %v838 = vsel %vm690, %v334, 0
    %840 = vmatprep.subr.mxu0 0.0
    %841 = vmatpush1.xpose.msra.mxu0 0.0
    %842 = vmatprep.subr.mxu0 0.0
    %843 = vmatpush1.xpose.msra.mxu0 0.0
    %844 = vmatprep.subr.mxu0 0.0
    %845 = vmatpush1.xpose.msra.mxu0 0.0
    %846 = vmatprep.subr.mxu0 0.0
    %847 = vmatpush1.xpose.msra.mxu0 0.0
    %848 = vmatprep.subr.mxu0 0.0
    %849 = vmatpush1.xpose.msra.mxu0 0.0
    %850 = vmatprep.subr.mxu0 0.0
    %851 = vmatpush1.xpose.msra.mxu0 0.0
    %852 = vmatprep.subr.mxu0 0.0
    %853 = vmatpush1.xpose.msra.mxu0 0.0
    %854 = vmatprep.subr.mxu0 0.0
    %855 = vmatpush1.xpose.msra.mxu0 0.0
    %856 = vmatprep.subr.mxu0 0.0
    %857 = vmatpush1.xpose.msra.mxu0 0.0
    %858 = vmatprep.subr.mxu0 0.0
    %859 = vmatpush1.xpose.msra.mxu0 0.0
    %860 = vmatprep.subr.mxu0 0.0
    %861 = vmatpush1.xpose.msra.mxu0 0.0
    %862 = vmatprep.subr.mxu0 0.0
    %863 = vmatpush1.xpose.msra.mxu0 0.0
    %864 = vmatprep.subr.mxu0 0.0
    %865 = vmatpush1.xpose.msra.mxu0 0.0
    %866 = vmatprep.subr.mxu0 0.0
    %867 = vmatpush1.xpose.msra.mxu0 0.0
    %868 = vmatprep.subr.mxu0 0.0
    %869 = vmatpush1.xpose.msra.mxu0 0.0
    %870 = vmatprep.subr.mxu0 0.0
    %871 = vmatpush1.xpose.msra.mxu0 %v838
    %872 = vmatprep.subr.mxu0 0.0
    %873 = vmatpush2.xpose.msra.mxu0 0.0
    %874 = vmatprep.subr.mxu0 0.0
    %875 = vmatpush2.xpose.msra.mxu0 0.0
    %876 = vmatprep.subr.mxu0 0.0
    %877 = vmatpush2.xpose.msra.mxu0 0.0
    %878 = vmatprep.subr.mxu0 0.0
    %879 = vmatpush2.xpose.msra.mxu0 0.0
    %880 = vmatprep.subr.mxu0 0.0
    %881 = vmatpush2.xpose.msra.mxu0 0.0
    %882 = vmatprep.subr.mxu0 0.0
    %883 = vmatpush2.xpose.msra.mxu0 0.0
    %884 = vmatprep.subr.mxu0 0.0
    %885 = vmatpush2.xpose.msra.mxu0 0.0
    %886 = vmatprep.subr.mxu0 0.0
    %887 = vmatpush2.xpose.msra.mxu0 0.0
    %888 = vmatprep.subr.mxu0 0.0
    %889 = vmatpush2.xpose.msra.mxu0 0.0
    %890 = vmatprep.subr.mxu0 0.0
    %891 = vmatpush2.xpose.msra.mxu0 0.0
    %892 = vmatprep.subr.mxu0 0.0
    %893 = vmatpush2.xpose.msra.mxu0 0.0
    %894 = vmatprep.subr.mxu0 0.0
    %895 = vmatpush2.xpose.msra.mxu0 0.0
    %896 = vmatprep.subr.mxu0 0.0
    %897 = vmatpush2.xpose.msra.mxu0 0.0
    %898 = vmatprep.subr.mxu0 0.0
    %899 = vmatpush2.xpose.msra.mxu0 0.0
    %900 = vmatprep.subr.mxu0 0.0
    %901 = vmatpush2.xpose.msra.mxu0 0.0
    %902 = vmatprep.subr.mxu0 0.0
    %903 = vmatpush2.xpose.msra.mxu0 0.0
    %904 = vmatprep.mubr.f32.mxu0 0.0
    %905 = vmatmul.mubr.f32.gmra.mxu0 %v838
    %v906 = vpop.f32.mrf.mxu0
    %v907 = vadd.f32 0.0, %v906
    %v908 = vpop.f32.mrf.mxu0
    %909 = vdwg.mxu0
    %v911 = vsel %vm690, %v404, 0
    %913 = vmatprep.subr.mxu0 0.0
    %914 = vmatpush1.xpose.msra.mxu0 0.0
    %915 = vmatprep.subr.mxu0 0.0
    %916 = vmatpush1.xpose.msra.mxu0 0.0
    %917 = vmatprep.subr.mxu0 0.0
    %918 = vmatpush1.xpose.msra.mxu0 0.0
    %919 = vmatprep.subr.mxu0 0.0
    %920 = vmatpush1.xpose.msra.mxu0 0.0
    %921 = vmatprep.subr.mxu0 0.0
    %922 = vmatpush1.xpose.msra.mxu0 0.0
    %923 = vmatprep.subr.mxu0 0.0
    %924 = vmatpush1.xpose.msra.mxu0 0.0
    %925 = vmatprep.subr.mxu0 0.0
    %926 = vmatpush1.xpose.msra.mxu0 0.0
    %927 = vmatprep.subr.mxu0 0.0
    %928 = vmatpush1.xpose.msra.mxu0 0.0
    %929 = vmatprep.subr.mxu0 0.0
    %930 = vmatpush1.xpose.msra.mxu0 0.0
    %931 = vmatprep.subr.mxu0 0.0
    %932 = vmatpush1.xpose.msra.mxu0 0.0
    %933 = vmatprep.subr.mxu0 0.0
    %934 = vmatpush1.xpose.msra.mxu0 0.0
    %935 = vmatprep.subr.mxu0 0.0
    %936 = vmatpush1.xpose.msra.mxu0 0.0
    %937 = vmatprep.subr.mxu0 0.0
    %938 = vmatpush1.xpose.msra.mxu0 0.0
    %939 = vmatprep.subr.mxu0 0.0
    %940 = vmatpush1.xpose.msra.mxu0 0.0
    %941 = vmatprep.subr.mxu0 0.0
    %942 = vmatpush1.xpose.msra.mxu0 0.0
    %943 = vmatprep.subr.mxu0 0.0
    %944 = vmatpush1.xpose.msra.mxu0 %v911
    %945 = vmatprep.subr.mxu0 0.0
    %946 = vmatpush2.xpose.msra.mxu0 0.0
    %947 = vmatprep.subr.mxu0 0.0
    %948 = vmatpush2.xpose.msra.mxu0 0.0
    %949 = vmatprep.subr.mxu0 0.0
    %950 = vmatpush2.xpose.msra.mxu0 0.0
    %951 = vmatprep.subr.mxu0 0.0
    %952 = vmatpush2.xpose.msra.mxu0 0.0
    %953 = vmatprep.subr.mxu0 0.0
    %954 = vmatpush2.xpose.msra.mxu0 0.0
    %955 = vmatprep.subr.mxu0 0.0
    %956 = vmatpush2.xpose.msra.mxu0 0.0
    %957 = vmatprep.subr.mxu0 0.0
    %958 = vmatpush2.xpose.msra.mxu0 0.0
    %959 = vmatprep.subr.mxu0 0.0
    %960 = vmatpush2.xpose.msra.mxu0 0.0
    %961 = vmatprep.subr.mxu0 0.0
    %962 = vmatpush2.xpose.msra.mxu0 0.0
    %963 = vmatprep.subr.mxu0 0.0
    %964 = vmatpush2.xpose.msra.mxu0 0.0
    %965 = vmatprep.subr.mxu0 0.0
    %966 = vmatpush2.xpose.msra.mxu0 0.0
    %967 = vmatprep.subr.mxu0 0.0
    %968 = vmatpush2.xpose.msra.mxu0 0.0
    %969 = vmatprep.subr.mxu0 0.0
    %970 = vmatpush2.xpose.msra.mxu0 0.0
    %971 = vmatprep.subr.mxu0 0.0
    %972 = vmatpush2.xpose.msra.mxu0 0.0
    %973 = vmatprep.subr.mxu0 0.0
    %974 = vmatpush2.xpose.msra.mxu0 0.0
    %975 = vmatprep.subr.mxu0 0.0
    %976 = vmatpush2.xpose.msra.mxu0 0.0
    %977 = vmatprep.mubr.f32.mxu0 0.0
    %978 = vmatmul.mubr.f32.gmra.mxu0 %v911
    %v979 = vpop.f32.mrf.mxu0
    %v980 = vadd.f32 0.0, %v979
    %v981 = vpop.f32.mrf.mxu0
    %982 = vdwg.mxu0
    %v984 = vsel %vm690, %v477, 0
    %986 = vmatprep.subr.mxu0 0.0
    %987 = vmatpush1.xpose.msra.mxu0 0.0
    %988 = vmatprep.subr.mxu0 0.0
    %989 = vmatpush1.xpose.msra.mxu0 0.0
    %990 = vmatprep.subr.mxu0 0.0
    %991 = vmatpush1.xpose.msra.mxu0 0.0
    %992 = vmatprep.subr.mxu0 0.0
    %993 = vmatpush1.xpose.msra.mxu0 0.0
    %994 = vmatprep.subr.mxu0 0.0
    %995 = vmatpush1.xpose.msra.mxu0 0.0
    %996 = vmatprep.subr.mxu0 0.0
    %997 = vmatpush1.xpose.msra.mxu0 0.0
    %998 = vmatprep.subr.mxu0 0.0
    %999 = vmatpush1.xpose.msra.mxu0 0.0
    %1000 = vmatprep.subr.mxu0 0.0
    %1001 = vmatpush1.xpose.msra.mxu0 0.0
    %1002 = vmatprep.subr.mxu0 0.0
    %1003 = vmatpush1.xpose.msra.mxu0 0.0
    %1004 = vmatprep.subr.mxu0 0.0
    %1005 = vmatpush1.xpose.msra.mxu0 0.0
    %1006 = vmatprep.subr.mxu0 0.0
    %1007 = vmatpush1.xpose.msra.mxu0 0.0
    %1008 = vmatprep.subr.mxu0 0.0
    %1009 = vmatpush1.xpose.msra.mxu0 0.0
    %1010 = vmatprep.subr.mxu0 0.0
    %1011 = vmatpush1.xpose.msra.mxu0 0.0
    %1012 = vmatprep.subr.mxu0 0.0
    %1013 = vmatpush1.xpose.msra.mxu0 0.0
    %1014 = vmatprep.subr.mxu0 0.0
    %1015 = vmatpush1.xpose.msra.mxu0 0.0
    %1016 = vmatprep.subr.mxu0 0.0
    %1017 = vmatpush1.xpose.msra.mxu0 %v984
    %1018 = vmatprep.subr.mxu0 0.0
    %1019 = vmatpush2.xpose.msra.mxu0 0.0
    %1020 = vmatprep.subr.mxu0 0.0
    %1021 = vmatpush2.xpose.msra.mxu0 0.0
    %1022 = vmatprep.subr.mxu0 0.0
    %1023 = vmatpush2.xpose.msra.mxu0 0.0
    %1024 = vmatprep.subr.mxu0 0.0
    %1025 = vmatpush2.xpose.msra.mxu0 0.0
    %1026 = vmatprep.subr.mxu0 0.0
    %1027 = vmatpush2.xpose.msra.mxu0 0.0
    %1028 = vmatprep.subr.mxu0 0.0
    %1029 = vmatpush2.xpose.msra.mxu0 0.0
    %1030 = vmatprep.subr.mxu0 0.0
    %1031 = vmatpush2.xpose.msra.mxu0 0.0
    %1032 = vmatprep.subr.mxu0 0.0
    %1033 = vmatpush2.xpose.msra.mxu0 0.0
    %1034 = vmatprep.subr.mxu0 0.0
    %1035 = vmatpush2.xpose.msra.mxu0 0.0
    %1036 = vmatprep.subr.mxu0 0.0
    %1037 = vmatpush2.xpose.msra.mxu0 0.0
    %1038 = vmatprep.subr.mxu0 0.0
    %1039 = vmatpush2.xpose.msra.mxu0 0.0
    %1040 = vmatprep.subr.mxu0 0.0
    %1041 = vmatpush2.xpose.msra.mxu0 0.0
    %1042 = vmatprep.subr.mxu0 0.0
    %1043 = vmatpush2.xpose.msra.mxu0 0.0
    %1044 = vmatprep.subr.mxu0 0.0
    %1045 = vmatpush2.xpose.msra.mxu0 0.0
    %1046 = vmatprep.subr.mxu0 0.0
    %1047 = vmatpush2.xpose.msra.mxu0 0.0
    %1048 = vmatprep.subr.mxu0 0.0
    %1049 = vmatpush2.xpose.msra.mxu0 0.0
    %1050 = vmatprep.mubr.f32.mxu0 0.0
    %1051 = vmatmul.mubr.f32.gmra.mxu0 %v984
    %v1052 = vpop.f32.mrf.mxu0
    %v1053 = vadd.f32 0.0, %v1052
    %v1054 = vpop.f32.mrf.mxu0
    %1055 = vdwg.mxu0
    %v1057 = vsel %vm690, %v547, 0
    %1059 = vmatprep.subr.mxu0 0.0
    %1060 = vmatpush1.xpose.msra.mxu0 0.0
    %1061 = vmatprep.subr.mxu0 0.0
    %1062 = vmatpush1.xpose.msra.mxu0 0.0
    %1063 = vmatprep.subr.mxu0 0.0
    %1064 = vmatpush1.xpose.msra.mxu0 0.0
    %1065 = vmatprep.subr.mxu0 0.0
    %1066 = vmatpush1.xpose.msra.mxu0 0.0
    %1067 = vmatprep.subr.mxu0 0.0
    %1068 = vmatpush1.xpose.msra.mxu0 0.0
    %1069 = vmatprep.subr.mxu0 0.0
    %1070 = vmatpush1.xpose.msra.mxu0 0.0
    %1071 = vmatprep.subr.mxu0 0.0
    %1072 = vmatpush1.xpose.msra.mxu0 0.0
    %1073 = vmatprep.subr.mxu0 0.0
    %1074 = vmatpush1.xpose.msra.mxu0 0.0
    %1075 = vmatprep.subr.mxu0 0.0
    %1076 = vmatpush1.xpose.msra.mxu0 0.0
    %1077 = vmatprep.subr.mxu0 0.0
    %1078 = vmatpush1.xpose.msra.mxu0 0.0
    %1079 = vmatprep.subr.mxu0 0.0
    %1080 = vmatpush1.xpose.msra.mxu0 0.0
    %1081 = vmatprep.subr.mxu0 0.0
    %1082 = vmatpush1.xpose.msra.mxu0 0.0
    %1083 = vmatprep.subr.mxu0 0.0
    %1084 = vmatpush1.xpose.msra.mxu0 0.0
    %1085 = vmatprep.subr.mxu0 0.0
    %1086 = vmatpush1.xpose.msra.mxu0 0.0
    %1087 = vmatprep.subr.mxu0 0.0
    %1088 = vmatpush1.xpose.msra.mxu0 0.0
    %1089 = vmatprep.subr.mxu0 0.0
    %1090 = vmatpush1.xpose.msra.mxu0 %v1057
    %1091 = vmatprep.subr.mxu0 0.0
    %1092 = vmatpush2.xpose.msra.mxu0 0.0
    %1093 = vmatprep.subr.mxu0 0.0
    %1094 = vmatpush2.xpose.msra.mxu0 0.0
    %1095 = vmatprep.subr.mxu0 0.0
    %1096 = vmatpush2.xpose.msra.mxu0 0.0
    %1097 = vmatprep.subr.mxu0 0.0
    %1098 = vmatpush2.xpose.msra.mxu0 0.0
    %1099 = vmatprep.subr.mxu0 0.0
    %1100 = vmatpush2.xpose.msra.mxu0 0.0
    %1101 = vmatprep.subr.mxu0 0.0
    %1102 = vmatpush2.xpose.msra.mxu0 0.0
    %1103 = vmatprep.subr.mxu0 0.0
    %1104 = vmatpush2.xpose.msra.mxu0 0.0
    %1105 = vmatprep.subr.mxu0 0.0
    %1106 = vmatpush2.xpose.msra.mxu0 0.0
    %1107 = vmatprep.subr.mxu0 0.0
    %1108 = vmatpush2.xpose.msra.mxu0 0.0
    %1109 = vmatprep.subr.mxu0 0.0
    %1110 = vmatpush2.xpose.msra.mxu0 0.0
    %1111 = vmatprep.subr.mxu0 0.0
    %1112 = vmatpush2.xpose.msra.mxu0 0.0
    %1113 = vmatprep.subr.mxu0 0.0
    %1114 = vmatpush2.xpose.msra.mxu0 0.0
    %1115 = vmatprep.subr.mxu0 0.0
    %1116 = vmatpush2.xpose.msra.mxu0 0.0
    %1117 = vmatprep.subr.mxu0 0.0
    %1118 = vmatpush2.xpose.msra.mxu0 0.0
    %1119 = vmatprep.subr.mxu0 0.0
    %1120 = vmatpush2.xpose.msra.mxu0 0.0
    %1121 = vmatprep.subr.mxu0 0.0
    %1122 = vmatpush2.xpose.msra.mxu0 0.0
    %1123 = vmatprep.mubr.f32.mxu0 0.0
    %1124 = vmatmul.mubr.f32.gmra.mxu0 %v1057
    %v1125 = vpop.f32.mrf.mxu0
    %v1126 = vadd.f32 0.0, %v1125
    %v1127 = vpop.f32.mrf.mxu0
    %1128 = vdwg.mxu0
    %v1130 = vsel %vm690, %v617, 0
    %1132 = vmatprep.subr.mxu0 0.0
    %1133 = vmatpush1.xpose.msra.mxu0 0.0
    %1134 = vmatprep.subr.mxu0 0.0
    %1135 = vmatpush1.xpose.msra.mxu0 0.0
    %1136 = vmatprep.subr.mxu0 0.0
    %1137 = vmatpush1.xpose.msra.mxu0 0.0
    %1138 = vmatprep.subr.mxu0 0.0
    %1139 = vmatpush1.xpose.msra.mxu0 0.0
    %1140 = vmatprep.subr.mxu0 0.0
    %1141 = vmatpush1.xpose.msra.mxu0 0.0
    %1142 = vmatprep.subr.mxu0 0.0
    %1143 = vmatpush1.xpose.msra.mxu0 0.0
    %1144 = vmatprep.subr.mxu0 0.0
    %1145 = vmatpush1.xpose.msra.mxu0 0.0
    %1146 = vmatprep.subr.mxu0 0.0
    %1147 = vmatpush1.xpose.msra.mxu0 0.0
    %1148 = vmatprep.subr.mxu0 0.0
    %1149 = vmatpush1.xpose.msra.mxu0 0.0
    %1150 = vmatprep.subr.mxu0 0.0
    %1151 = vmatpush1.xpose.msra.mxu0 0.0
    %1152 = vmatprep.subr.mxu0 0.0
    %1153 = vmatpush1.xpose.msra.mxu0 0.0
    %1154 = vmatprep.subr.mxu0 0.0
    %1155 = vmatpush1.xpose.msra.mxu0 0.0
    %1156 = vmatprep.subr.mxu0 0.0
    %1157 = vmatpush1.xpose.msra.mxu0 0.0
    %1158 = vmatprep.subr.mxu0 0.0
    %1159 = vmatpush1.xpose.msra.mxu0 0.0
    %1160 = vmatprep.subr.mxu0 0.0
    %1161 = vmatpush1.xpose.msra.mxu0 0.0
    %1162 = vmatprep.subr.mxu0 0.0
    %1163 = vmatpush1.xpose.msra.mxu0 %v1130
    %1164 = vmatprep.subr.mxu0 0.0
    %1165 = vmatpush2.xpose.msra.mxu0 0.0
    %1166 = vmatprep.subr.mxu0 0.0
    %1167 = vmatpush2.xpose.msra.mxu0 0.0
    %1168 = vmatprep.subr.mxu0 0.0
    %1169 = vmatpush2.xpose.msra.mxu0 0.0
    %1170 = vmatprep.subr.mxu0 0.0
    %1171 = vmatpush2.xpose.msra.mxu0 0.0
    %1172 = vmatprep.subr.mxu0 0.0
    %1173 = vmatpush2.xpose.msra.mxu0 0.0
    %1174 = vmatprep.subr.mxu0 0.0
    %1175 = vmatpush2.xpose.msra.mxu0 0.0
    %1176 = vmatprep.subr.mxu0 0.0
    %1177 = vmatpush2.xpose.msra.mxu0 0.0
    %1178 = vmatprep.subr.mxu0 0.0
    %1179 = vmatpush2.xpose.msra.mxu0 0.0
    %1180 = vmatprep.subr.mxu0 0.0
    %1181 = vmatpush2.xpose.msra.mxu0 0.0
    %1182 = vmatprep.subr.mxu0 0.0
    %1183 = vmatpush2.xpose.msra.mxu0 0.0
    %1184 = vmatprep.subr.mxu0 0.0
    %1185 = vmatpush2.xpose.msra.mxu0 0.0
    %1186 = vmatprep.subr.mxu0 0.0
    %1187 = vmatpush2.xpose.msra.mxu0 0.0
    %1188 = vmatprep.subr.mxu0 0.0
    %1189 = vmatpush2.xpose.msra.mxu0 0.0
    %1190 = vmatprep.subr.mxu0 0.0
    %1191 = vmatpush2.xpose.msra.mxu0 0.0
    %1192 = vmatprep.subr.mxu0 0.0
    %1193 = vmatpush2.xpose.msra.mxu0 0.0
    %1194 = vmatprep.subr.mxu0 0.0
    %1195 = vmatpush2.xpose.msra.mxu0 0.0
    %1196 = vmatprep.mubr.f32.mxu0 0.0
    %1197 = vmatmul.mubr.f32.gmra.mxu0 %v1130
    %v1198 = vpop.f32.mrf.mxu0
    %v1199 = vadd.f32 0.0, %v1198
    %v1200 = vpop.f32.mrf.mxu0
    %1201 = vdwg.mxu0
    %v1203 = vsel %vm690, %v687, 0
    %1205 = vmatprep.subr.mxu0 0.0
    %1206 = vmatpush1.xpose.msra.mxu0 0.0
    %1207 = vmatprep.subr.mxu0 0.0
    %1208 = vmatpush1.xpose.msra.mxu0 0.0
    %1209 = vmatprep.subr.mxu0 0.0
    %1210 = vmatpush1.xpose.msra.mxu0 0.0
    %1211 = vmatprep.subr.mxu0 0.0
    %1212 = vmatpush1.xpose.msra.mxu0 0.0
    %1213 = vmatprep.subr.mxu0 0.0
    %1214 = vmatpush1.xpose.msra.mxu0 0.0
    %1215 = vmatprep.subr.mxu0 0.0
    %1216 = vmatpush1.xpose.msra.mxu0 0.0
    %1217 = vmatprep.subr.mxu0 0.0
    %1218 = vmatpush1.xpose.msra.mxu0 0.0
    %1219 = vmatprep.subr.mxu0 0.0
    %1220 = vmatpush1.xpose.msra.mxu0 0.0
    %1221 = vmatprep.subr.mxu0 0.0
    %1222 = vmatpush1.xpose.msra.mxu0 0.0
    %1223 = vmatprep.subr.mxu0 0.0
    %1224 = vmatpush1.xpose.msra.mxu0 0.0
    %1225 = vmatprep.subr.mxu0 0.0
    %1226 = vmatpush1.xpose.msra.mxu0 0.0
    %1227 = vmatprep.subr.mxu0 0.0
    %1228 = vmatpush1.xpose.msra.mxu0 0.0
    %1229 = vmatprep.subr.mxu0 0.0
    %1230 = vmatpush1.xpose.msra.mxu0 0.0
    %1231 = vmatprep.subr.mxu0 0.0
    %1232 = vmatpush1.xpose.msra.mxu0 0.0
    %1233 = vmatprep.subr.mxu0 0.0
    %1234 = vmatpush1.xpose.msra.mxu0 0.0
    %1235 = vmatprep.subr.mxu0 0.0
    %1236 = vmatpush1.xpose.msra.mxu0 %v1203
    %1237 = vmatprep.subr.mxu0 0.0
    %1238 = vmatpush2.xpose.msra.mxu0 0.0
    %1239 = vmatprep.subr.mxu0 0.0
    %1240 = vmatpush2.xpose.msra.mxu0 0.0
    %1241 = vmatprep.subr.mxu0 0.0
    %1242 = vmatpush2.xpose.msra.mxu0 0.0
    %1243 = vmatprep.subr.mxu0 0.0
    %1244 = vmatpush2.xpose.msra.mxu0 0.0
    %1245 = vmatprep.subr.mxu0 0.0
    %1246 = vmatpush2.xpose.msra.mxu0 0.0
    %1247 = vmatprep.subr.mxu0 0.0
    %1248 = vmatpush2.xpose.msra.mxu0 0.0
    %1249 = vmatprep.subr.mxu0 0.0
    %1250 = vmatpush2.xpose.msra.mxu0 0.0
    %1251 = vmatprep.subr.mxu0 0.0
    %1252 = vmatpush2.xpose.msra.mxu0 0.0
    %1253 = vmatprep.subr.mxu0 0.0
    %1254 = vmatpush2.xpose.msra.mxu0 0.0
    %1255 = vmatprep.subr.mxu0 0.0
    %1256 = vmatpush2.xpose.msra.mxu0 0.0
    %1257 = vmatprep.subr.mxu0 0.0
    %1258 = vmatpush2.xpose.msra.mxu0 0.0
    %1259 = vmatprep.subr.mxu0 0.0
    %1260 = vmatpush2.xpose.msra.mxu0 0.0
    %1261 = vmatprep.subr.mxu0 0.0
    %1262 = vmatpush2.xpose.msra.mxu0 0.0
    %1263 = vmatprep.subr.mxu0 0.0
    %1264 = vmatpush2.xpose.msra.mxu0 0.0
    %1265 = vmatprep.subr.mxu0 0.0
    %1266 = vmatpush2.xpose.msra.mxu0 0.0
    %1267 = vmatprep.subr.mxu0 0.0
    %1268 = vmatpush2.xpose.msra.mxu0 0.0
    %1269 = vmatprep.mubr.f32.mxu0 0.0
    %1270 = vmatmul.mubr.f32.gmra.mxu0 %v1203
    %v1271 = vpop.f32.mrf.mxu0
    %v1272 = vadd.f32 0.0, %v1271
    %v1273 = vpop.f32.mrf.mxu0
    %1274 = vdwg.mxu0
    %v1275 = vmul.f32 %v761, 0.35355338
    %v1276 = vmul.f32 %v834, 0.35355338
    %v1277 = vmul.f32 %v907, 0.35355338
    %v1278 = vmul.f32 %v980, 0.35355338
    %v1279 = vmul.f32 %v1053, 0.35355338
    %v1280 = vmul.f32 %v1126, 0.35355338
    %v1281 = vmul.f32 %v1199, 0.35355338
    %v1282 = vmul.f32 %v1272, 0.35355338
    %v1283 = vld [vmem:[%s1] sm:$0x3]
    %v1284 = vmul.f32 %v1283, -10000.0
    %v1287 = vunpack.c.l.s4 1966171168
    %v1288 = vunpack.c.0.s8 %v1287
    %v1289 = vlaneseq
    %v1290 = vshrl.u32 %v1289, 7
    %v1291 = vsub.s32 %v1288, %v1290
    %v1292 = vrot.slane %v1284, %v1291
    %v1293 = vcombine.high %v1292, %v1292
    %v1295 = vunpack.c.l.s4 1966171168
    %v1296 = vunpack.c.0.s8 %v1295
    %v1297 = vlaneseq
    %v1298 = vshrl.u32 %v1297, 7
    %v1299 = vsub.s32 %v1296, %v1298
    %v1300 = vrot.slane %v1292, %v1299
    %v1302 = vunpack.c.l.s4 1966171168
    %v1303 = vunpack.c.0.s8 %v1302
    %v1304 = vlaneseq
    %v1305 = vshrl.u32 %v1304, 7
    %v1306 = vsub.s32 %v1303, %v1305
    %v1307 = vrot.slane %v1293, %v1306
    %v1308 = vlaneseq
    %v1309 = vshrl.u32 %v1308, 7
    %v1310 = vsub.s32 0, %v1309
    %v1311 = vrot.slane %v1300, %v1310
    %v1312 = vlaneseq
    %v1313 = vshrl.u32 %v1312, 7
    %v1314 = vsub.s32 0, %v1313
    %v1315 = vrot.slane %v1307, %v1314
    %v1318 = vadd.f32 %v1275, %v1311
    %v1319 = vadd.f32 %v1276, %v1311
    %v1320 = vadd.f32 %v1277, %v1311
    %v1321 = vadd.f32 %v1278, %v1311
    %v1322 = vadd.f32 %v1279, %v1315
    %v1323 = vadd.f32 %v1280, %v1315
    %v1324 = vadd.f32 %v1281, %v1315
    %v1325 = vadd.f32 %v1282, %v1315
    %1326 = vst.msk [vmem:[#allocation4] sm:$0xff] %vm690, %v1318
    %1327 = vst.msk [vmem:[#allocation4 + $0x8] sm:$0xff] %vm690, %v1319
    %1328 = vst.msk [vmem:[#allocation4 + $0x10] sm:$0xff] %vm690, %v1320
    %1329 = vst.msk [vmem:[#allocation4 + $0x18] sm:$0xff] %vm690, %v1321
    %1330 = vst.msk [vmem:[#allocation4 + $0x20] sm:$0xff] %vm690, %v1322
    %1331 = vst.msk [vmem:[#allocation4 + $0x28] sm:$0xff] %vm690, %v1323
    %1332 = vst.msk [vmem:[#allocation4 + $0x30] sm:$0xff] %vm690, %v1324
    %1333 = vst.msk [vmem:[#allocation4 + $0x38] sm:$0xff] %vm690, %v1325
    %v1334 = vsel %vm690, %v1318, -inf
    %1335 = vmax.xlane.f32.xlu0 %v1334
    %v1336 = vpop.xlane.xlu0 %1335
    %v1337 = vsel %vm690, %v1319, -inf
    %1338 = vmax.xlane.f32.xlu0 %v1337
    %v1339 = vpop.xlane.xlu0 %1338
    %v1340 = vsel %vm690, %v1320, -inf
    %1341 = vmax.xlane.f32.xlu0 %v1340
    %v1342 = vpop.xlane.xlu0 %1341
    %v1343 = vsel %vm690, %v1321, -inf
    %1344 = vmax.xlane.f32.xlu0 %v1343
    %v1345 = vpop.xlane.xlu0 %1344
    %v1346 = vsel %vm690, %v1322, -inf
    %1347 = vmax.xlane.f32.xlu0 %v1346
    %v1348 = vpop.xlane.xlu0 %1347
    %v1349 = vsel %vm690, %v1323, -inf
    %1350 = vmax.xlane.f32.xlu0 %v1349
    %v1351 = vpop.xlane.xlu0 %1350
    %v1352 = vsel %vm690, %v1324, -inf
    %1353 = vmax.xlane.f32.xlu0 %v1352
    %v1354 = vpop.xlane.xlu0 %1353
    %v1355 = vsel %vm690, %v1325, -inf
    %1356 = vmax.xlane.f32.xlu0 %v1355
    %v1357 = vpop.xlane.xlu0 %1356
    %v1358 = vsub.f32 %v1318, %v1336
    %v1359 = vsub.f32 %v1319, %v1339
    %v1360 = vsub.f32 %v1320, %v1342
    %v1361 = vsub.f32 %v1321, %v1345
    %v1362 = vsub.f32 %v1322, %v1348
    %v1363 = vsub.f32 %v1323, %v1351
    %v1364 = vsub.f32 %v1324, %v1354
    %v1365 = vsub.f32 %v1325, %v1357
    %v1366 = vmul.f32 %v1358, 1.442695
    %v1367 = vpow.pop %v1366
    %v1368 = vmul.f32 %v1359, 1.442695
    %v1369 = vpow.pop %v1368
    %v1370 = vmul.f32 %v1360, 1.442695
    %v1371 = vpow.pop %v1370
    %v1372 = vmul.f32 %v1361, 1.442695
    %v1373 = vpow.pop %v1372
    %v1374 = vmul.f32 %v1362, 1.442695
    %v1375 = vpow.pop %v1374
    %v1376 = vmul.f32 %v1363, 1.442695
    %v1377 = vpow.pop %v1376
    %v1378 = vmul.f32 %v1364, 1.442695
    %v1379 = vpow.pop %v1378
    %v1380 = vmul.f32 %v1365, 1.442695
    %v1381 = vpow.pop %v1380
    %v1382 = vsel %vm690, %v1367, 0.0
    %1383 = vadd.xlane.f32.xlu0 %v1382
    %v1384 = vpop.xlane.xlu0 %1383
    %v1385 = vsel %vm690, %v1369, 0.0
    %1386 = vadd.xlane.f32.xlu0 %v1385
    %v1387 = vpop.xlane.xlu0 %1386
    %v1388 = vsel %vm690, %v1371, 0.0
    %1389 = vadd.xlane.f32.xlu0 %v1388
    %v1390 = vpop.xlane.xlu0 %1389
    %v1391 = vsel %vm690, %v1373, 0.0
    %1392 = vadd.xlane.f32.xlu0 %v1391
    %v1393 = vpop.xlane.xlu0 %1392
    %v1394 = vsel %vm690, %v1375, 0.0
    %1395 = vadd.xlane.f32.xlu0 %v1394
    %v1396 = vpop.xlane.xlu0 %1395
    %v1397 = vsel %vm690, %v1377, 0.0
    %1398 = vadd.xlane.f32.xlu0 %v1397
    %v1399 = vpop.xlane.xlu0 %1398
    %v1400 = vsel %vm690, %v1379, 0.0
    %1401 = vadd.xlane.f32.xlu0 %v1400
    %v1402 = vpop.xlane.xlu0 %1401
    %v1403 = vsel %vm690, %v1381, 0.0
    %1404 = vadd.xlane.f32.xlu0 %v1403
    %v1405 = vpop.xlane.xlu0 %1404
    %v1406 = vrcp.pop %v1384
    %v1407 = vmul.f32 %v1367, %v1406
    %v1408 = vrcp.pop %v1387
    %v1409 = vmul.f32 %v1369, %v1408
    %v1410 = vrcp.pop %v1390
    %v1411 = vmul.f32 %v1371, %v1410
    %v1412 = vrcp.pop %v1393
    %v1413 = vmul.f32 %v1373, %v1412
    %v1414 = vrcp.pop %v1396
    %v1415 = vmul.f32 %v1375, %v1414
    %v1416 = vrcp.pop %v1399
    %v1417 = vmul.f32 %v1377, %v1416
    %v1418 = vrcp.pop %v1402
    %v1419 = vmul.f32 %v1379, %v1418
    %v1420 = vrcp.pop %v1405
    %v1421 = vmul.f32 %v1381, %v1420
    %1422 = vrot.lane.b32.xlu0 %v194, 120
    %v1423 = vpop.permute.xlu0 %1422
    %v1426 = vsel %vm690, %v1407, 0
    %1428 = vmatprep.subr.mxu0 0.0
    %1429 = vmatpush1.msra.mxu0 0.0
    %1430 = vmatprep.subr.mxu0 0.0
    %1431 = vmatpush1.msra.mxu0 0.0
    %1432 = vmatprep.subr.mxu0 0.0
    %1433 = vmatpush1.msra.mxu0 0.0
    %1434 = vmatprep.subr.mxu0 0.0
    %1435 = vmatpush1.msra.mxu0 0.0
    %1436 = vmatprep.subr.mxu0 0.0
    %1437 = vmatpush1.msra.mxu0 0.0
    %1438 = vmatprep.subr.mxu0 0.0
    %1439 = vmatpush1.msra.mxu0 0.0
    %1440 = vmatprep.subr.mxu0 0.0
    %1441 = vmatpush1.msra.mxu0 0.0
    %1442 = vmatprep.subr.mxu0 0.0
    %1443 = vmatpush1.msra.mxu0 0.0
    %1444 = vmatprep.subr.mxu0 0.0
    %1445 = vmatpush1.msra.mxu0 0.0
    %1446 = vmatprep.subr.mxu0 0.0
    %1447 = vmatpush1.msra.mxu0 0.0
    %1448 = vmatprep.subr.mxu0 0.0
    %1449 = vmatpush1.msra.mxu0 0.0
    %1450 = vmatprep.subr.mxu0 0.0
    %1451 = vmatpush1.msra.mxu0 0.0
    %1452 = vmatprep.subr.mxu0 0.0
    %1453 = vmatpush1.msra.mxu0 0.0
    %1454 = vmatprep.subr.mxu0 0.0
    %1455 = vmatpush1.msra.mxu0 0.0
    %1456 = vmatprep.subr.mxu0 0.0
    %1457 = vmatpush1.msra.mxu0 0.0
    %1458 = vmatprep.subr.mxu0 0.0
    %1459 = vmatpush1.msra.mxu0 %v1423
    %1460 = vmatprep.subr.mxu0 0.0
    %1461 = vmatpush2.msra.mxu0 0.0
    %1462 = vmatprep.subr.mxu0 0.0
    %1463 = vmatpush2.msra.mxu0 0.0
    %1464 = vmatprep.subr.mxu0 0.0
    %1465 = vmatpush2.msra.mxu0 0.0
    %1466 = vmatprep.subr.mxu0 0.0
    %1467 = vmatpush2.msra.mxu0 0.0
    %1468 = vmatprep.subr.mxu0 0.0
    %1469 = vmatpush2.msra.mxu0 0.0
    %1470 = vmatprep.subr.mxu0 0.0
    %1471 = vmatpush2.msra.mxu0 0.0
    %1472 = vmatprep.subr.mxu0 0.0
    %1473 = vmatpush2.msra.mxu0 0.0
    %1474 = vmatprep.subr.mxu0 0.0
    %1475 = vmatpush2.msra.mxu0 0.0
    %1476 = vmatprep.subr.mxu0 0.0
    %1477 = vmatpush2.msra.mxu0 0.0
    %1478 = vmatprep.subr.mxu0 0.0
    %1479 = vmatpush2.msra.mxu0 0.0
    %1480 = vmatprep.subr.mxu0 0.0
    %1481 = vmatpush2.msra.mxu0 0.0
    %1482 = vmatprep.subr.mxu0 0.0
    %1483 = vmatpush2.msra.mxu0 0.0
    %1484 = vmatprep.subr.mxu0 0.0
    %1485 = vmatpush2.msra.mxu0 0.0
    %1486 = vmatprep.subr.mxu0 0.0
    %1487 = vmatpush2.msra.mxu0 0.0
    %1488 = vmatprep.subr.mxu0 0.0
    %1489 = vmatpush2.msra.mxu0 0.0
    %1490 = vmatprep.subr.mxu0 0.0
    %1491 = vmatpush2.msra.mxu0 0.0
    %1492 = vmatprep.mubr.f32.mxu0 0.0
    %1493 = vmatmul.mubr.f32.gmra.mxu0 %v1426
    %v1494 = vpop.f32.mrf.mxu0
    %v1495 = vadd.f32 0.0, %v1494
    %v1496 = vpop.f32.mrf.mxu0
    %1497 = vdwg.mxu0
    %1498 = vrot.lane.b32.xlu0 %v264, 120
    %v1499 = vpop.permute.xlu0 %1498
    %v1502 = vsel %vm690, %v1409, 0
    %1504 = vmatprep.subr.mxu0 0.0
    %1505 = vmatpush1.msra.mxu0 0.0
    %1506 = vmatprep.subr.mxu0 0.0
    %1507 = vmatpush1.msra.mxu0 0.0
    %1508 = vmatprep.subr.mxu0 0.0
    %1509 = vmatpush1.msra.mxu0 0.0
    %1510 = vmatprep.subr.mxu0 0.0
    %1511 = vmatpush1.msra.mxu0 0.0
    %1512 = vmatprep.subr.mxu0 0.0
    %1513 = vmatpush1.msra.mxu0 0.0
    %1514 = vmatprep.subr.mxu0 0.0
    %1515 = vmatpush1.msra.mxu0 0.0
    %1516 = vmatprep.subr.mxu0 0.0
    %1517 = vmatpush1.msra.mxu0 0.0
    %1518 = vmatprep.subr.mxu0 0.0
    %1519 = vmatpush1.msra.mxu0 0.0
    %1520 = vmatprep.subr.mxu0 0.0
    %1521 = vmatpush1.msra.mxu0 0.0
    %1522 = vmatprep.subr.mxu0 0.0
    %1523 = vmatpush1.msra.mxu0 0.0
    %1524 = vmatprep.subr.mxu0 0.0
    %1525 = vmatpush1.msra.mxu0 0.0
    %1526 = vmatprep.subr.mxu0 0.0
    %1527 = vmatpush1.msra.mxu0 0.0
    %1528 = vmatprep.subr.mxu0 0.0
    %1529 = vmatpush1.msra.mxu0 0.0
    %1530 = vmatprep.subr.mxu0 0.0
    %1531 = vmatpush1.msra.mxu0 0.0
    %1532 = vmatprep.subr.mxu0 0.0
    %1533 = vmatpush1.msra.mxu0 0.0
    %1534 = vmatprep.subr.mxu0 0.0
    %1535 = vmatpush1.msra.mxu0 %v1499
    %1536 = vmatprep.subr.mxu0 0.0
    %1537 = vmatpush2.msra.mxu0 0.0
    %1538 = vmatprep.subr.mxu0 0.0
    %1539 = vmatpush2.msra.mxu0 0.0
    %1540 = vmatprep.subr.mxu0 0.0
    %1541 = vmatpush2.msra.mxu0 0.0
    %1542 = vmatprep.subr.mxu0 0.0
    %1543 = vmatpush2.msra.mxu0 0.0
    %1544 = vmatprep.subr.mxu0 0.0
    %1545 = vmatpush2.msra.mxu0 0.0
    %1546 = vmatprep.subr.mxu0 0.0
    %1547 = vmatpush2.msra.mxu0 0.0
    %1548 = vmatprep.subr.mxu0 0.0
    %1549 = vmatpush2.msra.mxu0 0.0
    %1550 = vmatprep.subr.mxu0 0.0
    %1551 = vmatpush2.msra.mxu0 0.0
    %1552 = vmatprep.subr.mxu0 0.0
    %1553 = vmatpush2.msra.mxu0 0.0
    %1554 = vmatprep.subr.mxu0 0.0
    %1555 = vmatpush2.msra.mxu0 0.0
    %1556 = vmatprep.subr.mxu0 0.0
    %1557 = vmatpush2.msra.mxu0 0.0
    %1558 = vmatprep.subr.mxu0 0.0
    %1559 = vmatpush2.msra.mxu0 0.0
    %1560 = vmatprep.subr.mxu0 0.0
    %1561 = vmatpush2.msra.mxu0 0.0
    %1562 = vmatprep.subr.mxu0 0.0
    %1563 = vmatpush2.msra.mxu0 0.0
    %1564 = vmatprep.subr.mxu0 0.0
    %1565 = vmatpush2.msra.mxu0 0.0
    %1566 = vmatprep.subr.mxu0 0.0
    %1567 = vmatpush2.msra.mxu0 0.0
    %1568 = vmatprep.mubr.f32.mxu0 0.0
    %1569 = vmatmul.mubr.f32.gmra.mxu0 %v1502
    %v1570 = vpop.f32.mrf.mxu0
    %v1571 = vadd.f32 0.0, %v1570
    %v1572 = vpop.f32.mrf.mxu0
    %1573 = vdwg.mxu0
    %1574 = vrot.lane.b32.xlu0 %v334, 120
    %v1575 = vpop.permute.xlu0 %1574
    %v1578 = vsel %vm690, %v1411, 0
    %1580 = vmatprep.subr.mxu0 0.0
    %1581 = vmatpush1.msra.mxu0 0.0
    %1582 = vmatprep.subr.mxu0 0.0
    %1583 = vmatpush1.msra.mxu0 0.0
    %1584 = vmatprep.subr.mxu0 0.0
    %1585 = vmatpush1.msra.mxu0 0.0
    %1586 = vmatprep.subr.mxu0 0.0
    %1587 = vmatpush1.msra.mxu0 0.0
    %1588 = vmatprep.subr.mxu0 0.0
    %1589 = vmatpush1.msra.mxu0 0.0
    %1590 = vmatprep.subr.mxu0 0.0
    %1591 = vmatpush1.msra.mxu0 0.0
    %1592 = vmatprep.subr.mxu0 0.0
    %1593 = vmatpush1.msra.mxu0 0.0
    %1594 = vmatprep.subr.mxu0 0.0
    %1595 = vmatpush1.msra.mxu0 0.0
    %1596 = vmatprep.subr.mxu0 0.0
    %1597 = vmatpush1.msra.mxu0 0.0
    %1598 = vmatprep.subr.mxu0 0.0
    %1599 = vmatpush1.msra.mxu0 0.0
    %1600 = vmatprep.subr.mxu0 0.0
    %1601 = vmatpush1.msra.mxu0 0.0
    %1602 = vmatprep.subr.mxu0 0.0
    %1603 = vmatpush1.msra.mxu0 0.0
    %1604 = vmatprep.subr.mxu0 0.0
    %1605 = vmatpush1.msra.mxu0 0.0
    %1606 = vmatprep.subr.mxu0 0.0
    %1607 = vmatpush1.msra.mxu0 0.0
    %1608 = vmatprep.subr.mxu0 0.0
    %1609 = vmatpush1.msra.mxu0 0.0
    %1610 = vmatprep.subr.mxu0 0.0
    %1611 = vmatpush1.msra.mxu0 %v1575
    %1612 = vmatprep.subr.mxu0 0.0
    %1613 = vmatpush2.msra.mxu0 0.0
    %1614 = vmatprep.subr.mxu0 0.0
    %1615 = vmatpush2.msra.mxu0 0.0
    %1616 = vmatprep.subr.mxu0 0.0
    %1617 = vmatpush2.msra.mxu0 0.0
    %1618 = vmatprep.subr.mxu0 0.0
    %1619 = vmatpush2.msra.mxu0 0.0
    %1620 = vmatprep.subr.mxu0 0.0
    %1621 = vmatpush2.msra.mxu0 0.0
    %1622 = vmatprep.subr.mxu0 0.0
    %1623 = vmatpush2.msra.mxu0 0.0
    %1624 = vmatprep.subr.mxu0 0.0
    %1625 = vmatpush2.msra.mxu0 0.0
    %1626 = vmatprep.subr.mxu0 0.0
    %1627 = vmatpush2.msra.mxu0 0.0
    %1628 = vmatprep.subr.mxu0 0.0
    %1629 = vmatpush2.msra.mxu0 0.0
    %1630 = vmatprep.subr.mxu0 0.0
    %1631 = vmatpush2.msra.mxu0 0.0
    %1632 = vmatprep.subr.mxu0 0.0
    %1633 = vmatpush2.msra.mxu0 0.0
    %1634 = vmatprep.subr.mxu0 0.0
    %1635 = vmatpush2.msra.mxu0 0.0
    %1636 = vmatprep.subr.mxu0 0.0
    %1637 = vmatpush2.msra.mxu0 0.0
    %1638 = vmatprep.subr.mxu0 0.0
    %1639 = vmatpush2.msra.mxu0 0.0
    %1640 = vmatprep.subr.mxu0 0.0
    %1641 = vmatpush2.msra.mxu0 0.0
    %1642 = vmatprep.subr.mxu0 0.0
    %1643 = vmatpush2.msra.mxu0 0.0
    %1644 = vmatprep.mubr.f32.mxu0 0.0
    %1645 = vmatmul.mubr.f32.gmra.mxu0 %v1578
    %v1646 = vpop.f32.mrf.mxu0
    %v1647 = vadd.f32 0.0, %v1646
    %v1648 = vpop.f32.mrf.mxu0
    %1649 = vdwg.mxu0
    %1650 = vrot.lane.b32.xlu0 %v404, 120
    %v1651 = vpop.permute.xlu0 %1650
    %v1654 = vsel %vm690, %v1413, 0
    %1656 = vmatprep.subr.mxu0 0.0
    %1657 = vmatpush1.msra.mxu0 0.0
    %1658 = vmatprep.subr.mxu0 0.0
    %1659 = vmatpush1.msra.mxu0 0.0
    %1660 = vmatprep.subr.mxu0 0.0
    %1661 = vmatpush1.msra.mxu0 0.0
    %1662 = vmatprep.subr.mxu0 0.0
    %1663 = vmatpush1.msra.mxu0 0.0
    %1664 = vmatprep.subr.mxu0 0.0
    %1665 = vmatpush1.msra.mxu0 0.0
    %1666 = vmatprep.subr.mxu0 0.0
    %1667 = vmatpush1.msra.mxu0 0.0
    %1668 = vmatprep.subr.mxu0 0.0
    %1669 = vmatpush1.msra.mxu0 0.0
    %1670 = vmatprep.subr.mxu0 0.0
    %1671 = vmatpush1.msra.mxu0 0.0
    %1672 = vmatprep.subr.mxu0 0.0
    %1673 = vmatpush1.msra.mxu0 0.0
    %1674 = vmatprep.subr.mxu0 0.0
    %1675 = vmatpush1.msra.mxu0 0.0
    %1676 = vmatprep.subr.mxu0 0.0
    %1677 = vmatpush1.msra.mxu0 0.0
    %1678 = vmatprep.subr.mxu0 0.0
    %1679 = vmatpush1.msra.mxu0 0.0
    %1680 = vmatprep.subr.mxu0 0.0
    %1681 = vmatpush1.msra.mxu0 0.0
    %1682 = vmatprep.subr.mxu0 0.0
    %1683 = vmatpush1.msra.mxu0 0.0
    %1684 = vmatprep.subr.mxu0 0.0
    %1685 = vmatpush1.msra.mxu0 0.0
    %1686 = vmatprep.subr.mxu0 0.0
    %1687 = vmatpush1.msra.mxu0 %v1651
    %1688 = vmatprep.subr.mxu0 0.0
    %1689 = vmatpush2.msra.mxu0 0.0
    %1690 = vmatprep.subr.mxu0 0.0
    %1691 = vmatpush2.msra.mxu0 0.0
    %1692 = vmatprep.subr.mxu0 0.0
    %1693 = vmatpush2.msra.mxu0 0.0
    %1694 = vmatprep.subr.mxu0 0.0
    %1695 = vmatpush2.msra.mxu0 0.0
    %1696 = vmatprep.subr.mxu0 0.0
    %1697 = vmatpush2.msra.mxu0 0.0
    %1698 = vmatprep.subr.mxu0 0.0
    %1699 = vmatpush2.msra.mxu0 0.0
    %1700 = vmatprep.subr.mxu0 0.0
    %1701 = vmatpush2.msra.mxu0 0.0
    %1702 = vmatprep.subr.mxu0 0.0
    %1703 = vmatpush2.msra.mxu0 0.0
    %1704 = vmatprep.subr.mxu0 0.0
    %1705 = vmatpush2.msra.mxu0 0.0
    %1706 = vmatprep.subr.mxu0 0.0
    %1707 = vmatpush2.msra.mxu0 0.0
    %1708 = vmatprep.subr.mxu0 0.0
    %1709 = vmatpush2.msra.mxu0 0.0
    %1710 = vmatprep.subr.mxu0 0.0
    %1711 = vmatpush2.msra.mxu0 0.0
    %1712 = vmatprep.subr.mxu0 0.0
    %1713 = vmatpush2.msra.mxu0 0.0
    %1714 = vmatprep.subr.mxu0 0.0
    %1715 = vmatpush2.msra.mxu0 0.0
    %1716 = vmatprep.subr.mxu0 0.0
    %1717 = vmatpush2.msra.mxu0 0.0
    %1718 = vmatprep.subr.mxu0 0.0
    %1719 = vmatpush2.msra.mxu0 0.0
    %1720 = vmatprep.mubr.f32.mxu0 0.0
    %1721 = vmatmul.mubr.f32.gmra.mxu0 %v1654
    %v1722 = vpop.f32.mrf.mxu0
    %v1723 = vadd.f32 0.0, %v1722
    %v1724 = vpop.f32.mrf.mxu0
    %1725 = vdwg.mxu0
    %1726 = vrot.lane.b32.xlu0 %v477, 120
    %v1727 = vpop.permute.xlu0 %1726
    %v1730 = vsel %vm690, %v1415, 0
    %1732 = vmatprep.subr.mxu0 0.0
    %1733 = vmatpush1.msra.mxu0 0.0
    %1734 = vmatprep.subr.mxu0 0.0
    %1735 = vmatpush1.msra.mxu0 0.0
    %1736 = vmatprep.subr.mxu0 0.0
    %1737 = vmatpush1.msra.mxu0 0.0
    %1738 = vmatprep.subr.mxu0 0.0
    %1739 = vmatpush1.msra.mxu0 0.0
    %1740 = vmatprep.subr.mxu0 0.0
    %1741 = vmatpush1.msra.mxu0 0.0
    %1742 = vmatprep.subr.mxu0 0.0
    %1743 = vmatpush1.msra.mxu0 0.0
    %1744 = vmatprep.subr.mxu0 0.0
    %1745 = vmatpush1.msra.mxu0 0.0
    %1746 = vmatprep.subr.mxu0 0.0
    %1747 = vmatpush1.msra.mxu0 0.0
    %1748 = vmatprep.subr.mxu0 0.0
    %1749 = vmatpush1.msra.mxu0 0.0
    %1750 = vmatprep.subr.mxu0 0.0
    %1751 = vmatpush1.msra.mxu0 0.0
    %1752 = vmatprep.subr.mxu0 0.0
    %1753 = vmatpush1.msra.mxu0 0.0
    %1754 = vmatprep.subr.mxu0 0.0
    %1755 = vmatpush1.msra.mxu0 0.0
    %1756 = vmatprep.subr.mxu0 0.0
    %1757 = vmatpush1.msra.mxu0 0.0
    %1758 = vmatprep.subr.mxu0 0.0
    %1759 = vmatpush1.msra.mxu0 0.0
    %1760 = vmatprep.subr.mxu0 0.0
    %1761 = vmatpush1.msra.mxu0 0.0
    %1762 = vmatprep.subr.mxu0 0.0
    %1763 = vmatpush1.msra.mxu0 %v1727
    %1764 = vmatprep.subr.mxu0 0.0
    %1765 = vmatpush2.msra.mxu0 0.0
    %1766 = vmatprep.subr.mxu0 0.0
    %1767 = vmatpush2.msra.mxu0 0.0
    %1768 = vmatprep.subr.mxu0 0.0
    %1769 = vmatpush2.msra.mxu0 0.0
    %1770 = vmatprep.subr.mxu0 0.0
    %1771 = vmatpush2.msra.mxu0 0.0
    %1772 = vmatprep.subr.mxu0 0.0
    %1773 = vmatpush2.msra.mxu0 0.0
    %1774 = vmatprep.subr.mxu0 0.0
    %1775 = vmatpush2.msra.mxu0 0.0
    %1776 = vmatprep.subr.mxu0 0.0
    %1777 = vmatpush2.msra.mxu0 0.0
    %1778 = vmatprep.subr.mxu0 0.0
    %1779 = vmatpush2.msra.mxu0 0.0
    %1780 = vmatprep.subr.mxu0 0.0
    %1781 = vmatpush2.msra.mxu0 0.0
    %1782 = vmatprep.subr.mxu0 0.0
    %1783 = vmatpush2.msra.mxu0 0.0
    %1784 = vmatprep.subr.mxu0 0.0
    %1785 = vmatpush2.msra.mxu0 0.0
    %1786 = vmatprep.subr.mxu0 0.0
    %1787 = vmatpush2.msra.mxu0 0.0
    %1788 = vmatprep.subr.mxu0 0.0
    %1789 = vmatpush2.msra.mxu0 0.0
    %1790 = vmatprep.subr.mxu0 0.0
    %1791 = vmatpush2.msra.mxu0 0.0
    %1792 = vmatprep.subr.mxu0 0.0
    %1793 = vmatpush2.msra.mxu0 0.0
    %1794 = vmatprep.subr.mxu0 0.0
    %1795 = vmatpush2.msra.mxu0 0.0
    %1796 = vmatprep.mubr.f32.mxu0 0.0
    %1797 = vmatmul.mubr.f32.gmra.mxu0 %v1730
    %v1798 = vpop.f32.mrf.mxu0
    %v1799 = vadd.f32 0.0, %v1798
    %v1800 = vpop.f32.mrf.mxu0
    %1801 = vdwg.mxu0
    %1802 = vrot.lane.b32.xlu0 %v547, 120
    %v1803 = vpop.permute.xlu0 %1802
    %v1806 = vsel %vm690, %v1417, 0
    %1808 = vmatprep.subr.mxu0 0.0
    %1809 = vmatpush1.msra.mxu0 0.0
    %1810 = vmatprep.subr.mxu0 0.0
    %1811 = vmatpush1.msra.mxu0 0.0
    %1812 = vmatprep.subr.mxu0 0.0
    %1813 = vmatpush1.msra.mxu0 0.0
    %1814 = vmatprep.subr.mxu0 0.0
    %1815 = vmatpush1.msra.mxu0 0.0
    %1816 = vmatprep.subr.mxu0 0.0
    %1817 = vmatpush1.msra.mxu0 0.0
    %1818 = vmatprep.subr.mxu0 0.0
    %1819 = vmatpush1.msra.mxu0 0.0
    %1820 = vmatprep.subr.mxu0 0.0
    %1821 = vmatpush1.msra.mxu0 0.0
    %1822 = vmatprep.subr.mxu0 0.0
    %1823 = vmatpush1.msra.mxu0 0.0
    %1824 = vmatprep.subr.mxu0 0.0
    %1825 = vmatpush1.msra.mxu0 0.0
    %1826 = vmatprep.subr.mxu0 0.0
    %1827 = vmatpush1.msra.mxu0 0.0
    %1828 = vmatprep.subr.mxu0 0.0
    %1829 = vmatpush1.msra.mxu0 0.0
    %1830 = vmatprep.subr.mxu0 0.0
    %1831 = vmatpush1.msra.mxu0 0.0
    %1832 = vmatprep.subr.mxu0 0.0
    %1833 = vmatpush1.msra.mxu0 0.0
    %1834 = vmatprep.subr.mxu0 0.0
    %1835 = vmatpush1.msra.mxu0 0.0
    %1836 = vmatprep.subr.mxu0 0.0
    %1837 = vmatpush1.msra.mxu0 0.0
    %1838 = vmatprep.subr.mxu0 0.0
    %1839 = vmatpush1.msra.mxu0 %v1803
    %1840 = vmatprep.subr.mxu0 0.0
    %1841 = vmatpush2.msra.mxu0 0.0
    %1842 = vmatprep.subr.mxu0 0.0
    %1843 = vmatpush2.msra.mxu0 0.0
    %1844 = vmatprep.subr.mxu0 0.0
    %1845 = vmatpush2.msra.mxu0 0.0
    %1846 = vmatprep.subr.mxu0 0.0
    %1847 = vmatpush2.msra.mxu0 0.0
    %1848 = vmatprep.subr.mxu0 0.0
    %1849 = vmatpush2.msra.mxu0 0.0
    %1850 = vmatprep.subr.mxu0 0.0
    %1851 = vmatpush2.msra.mxu0 0.0
    %1852 = vmatprep.subr.mxu0 0.0
    %1853 = vmatpush2.msra.mxu0 0.0
    %1854 = vmatprep.subr.mxu0 0.0
    %1855 = vmatpush2.msra.mxu0 0.0
    %1856 = vmatprep.subr.mxu0 0.0
    %1857 = vmatpush2.msra.mxu0 0.0
    %1858 = vmatprep.subr.mxu0 0.0
    %1859 = vmatpush2.msra.mxu0 0.0
    %1860 = vmatprep.subr.mxu0 0.0
    %1861 = vmatpush2.msra.mxu0 0.0
    %1862 = vmatprep.subr.mxu0 0.0
    %1863 = vmatpush2.msra.mxu0 0.0
    %1864 = vmatprep.subr.mxu0 0.0
    %1865 = vmatpush2.msra.mxu0 0.0
    %1866 = vmatprep.subr.mxu0 0.0
    %1867 = vmatpush2.msra.mxu0 0.0
    %1868 = vmatprep.subr.mxu0 0.0
    %1869 = vmatpush2.msra.mxu0 0.0
    %1870 = vmatprep.subr.mxu0 0.0
    %1871 = vmatpush2.msra.mxu0 0.0
    %1872 = vmatprep.mubr.f32.mxu0 0.0
    %1873 = vmatmul.mubr.f32.gmra.mxu0 %v1806
    %v1874 = vpop.f32.mrf.mxu0
    %v1875 = vadd.f32 0.0, %v1874
    %v1876 = vpop.f32.mrf.mxu0
    %1877 = vdwg.mxu0
    %1878 = vrot.lane.b32.xlu0 %v617, 120
    %v1879 = vpop.permute.xlu0 %1878
    %v1882 = vsel %vm690, %v1419, 0
    %1884 = vmatprep.subr.mxu0 0.0
    %1885 = vmatpush1.msra.mxu0 0.0
    %1886 = vmatprep.subr.mxu0 0.0
    %1887 = vmatpush1.msra.mxu0 0.0
    %1888 = vmatprep.subr.mxu0 0.0
    %1889 = vmatpush1.msra.mxu0 0.0
    %1890 = vmatprep.subr.mxu0 0.0
    %1891 = vmatpush1.msra.mxu0 0.0
    %1892 = vmatprep.subr.mxu0 0.0
    %1893 = vmatpush1.msra.mxu0 0.0
    %1894 = vmatprep.subr.mxu0 0.0
    %1895 = vmatpush1.msra.mxu0 0.0
    %1896 = vmatprep.subr.mxu0 0.0
    %1897 = vmatpush1.msra.mxu0 0.0
    %1898 = vmatprep.subr.mxu0 0.0
    %1899 = vmatpush1.msra.mxu0 0.0
    %1900 = vmatprep.subr.mxu0 0.0
    %1901 = vmatpush1.msra.mxu0 0.0
    %1902 = vmatprep.subr.mxu0 0.0
    %1903 = vmatpush1.msra.mxu0 0.0
    %1904 = vmatprep.subr.mxu0 0.0
    %1905 = vmatpush1.msra.mxu0 0.0
    %1906 = vmatprep.subr.mxu0 0.0
    %1907 = vmatpush1.msra.mxu0 0.0
    %1908 = vmatprep.subr.mxu0 0.0
    %1909 = vmatpush1.msra.mxu0 0.0
    %1910 = vmatprep.subr.mxu0 0.0
    %1911 = vmatpush1.msra.mxu0 0.0
    %1912 = vmatprep.subr.mxu0 0.0
    %1913 = vmatpush1.msra.mxu0 0.0
    %1914 = vmatprep.subr.mxu0 0.0
    %1915 = vmatpush1.msra.mxu0 %v1879
    %1916 = vmatprep.subr.mxu0 0.0
    %1917 = vmatpush2.msra.mxu0 0.0
    %1918 = vmatprep.subr.mxu0 0.0
    %1919 = vmatpush2.msra.mxu0 0.0
    %1920 = vmatprep.subr.mxu0 0.0
    %1921 = vmatpush2.msra.mxu0 0.0
    %1922 = vmatprep.subr.mxu0 0.0
    %1923 = vmatpush2.msra.mxu0 0.0
    %1924 = vmatprep.subr.mxu0 0.0
    %1925 = vmatpush2.msra.mxu0 0.0
    %1926 = vmatprep.subr.mxu0 0.0
    %1927 = vmatpush2.msra.mxu0 0.0
    %1928 = vmatprep.subr.mxu0 0.0
    %1929 = vmatpush2.msra.mxu0 0.0
    %1930 = vmatprep.subr.mxu0 0.0
    %1931 = vmatpush2.msra.mxu0 0.0
    %1932 = vmatprep.subr.mxu0 0.0
    %1933 = vmatpush2.msra.mxu0 0.0
    %1934 = vmatprep.subr.mxu0 0.0
    %1935 = vmatpush2.msra.mxu0 0.0
    %1936 = vmatprep.subr.mxu0 0.0
    %1937 = vmatpush2.msra.mxu0 0.0
    %1938 = vmatprep.subr.mxu0 0.0
    %1939 = vmatpush2.msra.mxu0 0.0
    %1940 = vmatprep.subr.mxu0 0.0
    %1941 = vmatpush2.msra.mxu0 0.0
    %1942 = vmatprep.subr.mxu0 0.0
    %1943 = vmatpush2.msra.mxu0 0.0
    %1944 = vmatprep.subr.mxu0 0.0
    %1945 = vmatpush2.msra.mxu0 0.0
    %1946 = vmatprep.subr.mxu0 0.0
    %1947 = vmatpush2.msra.mxu0 0.0
    %1948 = vmatprep.mubr.f32.mxu0 0.0
    %1949 = vmatmul.mubr.f32.gmra.mxu0 %v1882
    %v1950 = vpop.f32.mrf.mxu0
    %v1951 = vadd.f32 0.0, %v1950
    %v1952 = vpop.f32.mrf.mxu0
    %1953 = vdwg.mxu0
    %1954 = vrot.lane.b32.xlu0 %v687, 120
    %v1955 = vpop.permute.xlu0 %1954
    %v1958 = vsel %vm690, %v1421, 0
    %1960 = vmatprep.subr.mxu0 0.0
    %1961 = vmatpush1.msra.mxu0 0.0
    %1962 = vmatprep.subr.mxu0 0.0
    %1963 = vmatpush1.msra.mxu0 0.0
    %1964 = vmatprep.subr.mxu0 0.0
    %1965 = vmatpush1.msra.mxu0 0.0
    %1966 = vmatprep.subr.mxu0 0.0
    %1967 = vmatpush1.msra.mxu0 0.0
    %1968 = vmatprep.subr.mxu0 0.0
    %1969 = vmatpush1.msra.mxu0 0.0
    %1970 = vmatprep.subr.mxu0 0.0
    %1971 = vmatpush1.msra.mxu0 0.0
    %1972 = vmatprep.subr.mxu0 0.0
    %1973 = vmatpush1.msra.mxu0 0.0
    %1974 = vmatprep.subr.mxu0 0.0
    %1975 = vmatpush1.msra.mxu0 0.0
    %1976 = vmatprep.subr.mxu0 0.0
    %1977 = vmatpush1.msra.mxu0 0.0
    %1978 = vmatprep.subr.mxu0 0.0
    %1979 = vmatpush1.msra.mxu0 0.0
    %1980 = vmatprep.subr.mxu0 0.0
    %1981 = vmatpush1.msra.mxu0 0.0
    %1982 = vmatprep.subr.mxu0 0.0
    %1983 = vmatpush1.msra.mxu0 0.0
    %1984 = vmatprep.subr.mxu0 0.0
    %1985 = vmatpush1.msra.mxu0 0.0
    %1986 = vmatprep.subr.mxu0 0.0
    %1987 = vmatpush1.msra.mxu0 0.0
    %1988 = vmatprep.subr.mxu0 0.0
    %1989 = vmatpush1.msra.mxu0 0.0
    %1990 = vmatprep.subr.mxu0 0.0
    %1991 = vmatpush1.msra.mxu0 %v1955
    %1992 = vmatprep.subr.mxu0 0.0
    %1993 = vmatpush2.msra.mxu0 0.0
    %1994 = vmatprep.subr.mxu0 0.0
    %1995 = vmatpush2.msra.mxu0 0.0
    %1996 = vmatprep.subr.mxu0 0.0
    %1997 = vmatpush2.msra.mxu0 0.0
    %1998 = vmatprep.subr.mxu0 0.0
    %1999 = vmatpush2.msra.mxu0 0.0
    %2000 = vmatprep.subr.mxu0 0.0
    %2001 = vmatpush2.msra.mxu0 0.0
    %2002 = vmatprep.subr.mxu0 0.0
    %2003 = vmatpush2.msra.mxu0 0.0
    %2004 = vmatprep.subr.mxu0 0.0
    %2005 = vmatpush2.msra.mxu0 0.0
    %2006 = vmatprep.subr.mxu0 0.0
    %2007 = vmatpush2.msra.mxu0 0.0
    %2008 = vmatprep.subr.mxu0 0.0
    %2009 = vmatpush2.msra.mxu0 0.0
    %2010 = vmatprep.subr.mxu0 0.0
    %2011 = vmatpush2.msra.mxu0 0.0
    %2012 = vmatprep.subr.mxu0 0.0
    %2013 = vmatpush2.msra.mxu0 0.0
    %2014 = vmatprep.subr.mxu0 0.0
    %2015 = vmatpush2.msra.mxu0 0.0
    %2016 = vmatprep.subr.mxu0 0.0
    %2017 = vmatpush2.msra.mxu0 0.0
    %2018 = vmatprep.subr.mxu0 0.0
    %2019 = vmatpush2.msra.mxu0 0.0
    %2020 = vmatprep.subr.mxu0 0.0
    %2021 = vmatpush2.msra.mxu0 0.0
    %2022 = vmatprep.subr.mxu0 0.0
    %2023 = vmatpush2.msra.mxu0 0.0
    %2024 = vmatprep.mubr.f32.mxu0 0.0
    %2025 = vmatmul.mubr.f32.gmra.mxu0 %v1958
    %v2026 = vpop.f32.mrf.mxu0
    %v2027 = vadd.f32 0.0, %v2026
    %v2028 = vpop.f32.mrf.mxu0
    %2029 = vdwg.mxu0
    %v2030 = vld [vmem:[%s4] sm:$0xff]
    %v2031 = vld [vmem:[%s4 + $0x8] sm:$0xff]
    %v2032 = vld [vmem:[%s4 + $0x10] sm:$0xff]
    %v2033 = vld [vmem:[%s4 + $0x18] sm:$0xff]
    %v2034 = vld [vmem:[%s4 + $0x20] sm:$0xff]
    %v2035 = vld [vmem:[%s4 + $0x28] sm:$0xff]
    %v2036 = vld [vmem:[%s4 + $0x30] sm:$0xff]
    %v2037 = vld [vmem:[%s4 + $0x38] sm:$0xff]
    %v2039 = vsel %vm690, %v1495, 0
    %2041 = vmatprep.subr.mxu0 0.0
    %2042 = vmatpush1.msra.mxu0 0.0
    %2043 = vmatprep.subr.mxu0 0.0
    %2044 = vmatpush1.msra.mxu0 0.0
    %2045 = vmatprep.subr.mxu0 0.0
    %2046 = vmatpush1.msra.mxu0 0.0
    %2047 = vmatprep.subr.mxu0 0.0
    %2048 = vmatpush1.msra.mxu0 0.0
    %2049 = vmatprep.subr.mxu0 0.0
    %2050 = vmatpush1.msra.mxu0 0.0
    %2051 = vmatprep.subr.mxu0 0.0
    %2052 = vmatpush1.msra.mxu0 0.0
    %2053 = vmatprep.subr.mxu0 0.0
    %2054 = vmatpush1.msra.mxu0 0.0
    %2055 = vmatprep.subr.mxu0 0.0
    %2056 = vmatpush1.msra.mxu0 0.0
    %2057 = vmatprep.subr.mxu0 0.0
    %2058 = vmatpush1.msra.mxu0 0.0
    %2059 = vmatprep.subr.mxu0 0.0
    %2060 = vmatpush1.msra.mxu0 0.0
    %2061 = vmatprep.subr.mxu0 0.0
    %2062 = vmatpush1.msra.mxu0 0.0
    %2063 = vmatprep.subr.mxu0 0.0
    %2064 = vmatpush1.msra.mxu0 0.0
    %2065 = vmatprep.subr.mxu0 0.0
    %2066 = vmatpush1.msra.mxu0 0.0
    %2067 = vmatprep.subr.mxu0 0.0
    %2068 = vmatpush1.msra.mxu0 0.0
    %2069 = vmatprep.subr.mxu0 0.0
    %2070 = vmatpush1.msra.mxu0 0.0
    %2071 = vmatprep.subr.mxu0 0.0
    %2072 = vmatpush1.msra.mxu0 %v2030
    %2073 = vmatprep.subr.mxu0 0.0
    %2074 = vmatpush2.msra.mxu0 0.0
    %2075 = vmatprep.subr.mxu0 0.0
    %2076 = vmatpush2.msra.mxu0 0.0
    %2077 = vmatprep.subr.mxu0 0.0
    %2078 = vmatpush2.msra.mxu0 0.0
    %2079 = vmatprep.subr.mxu0 0.0
    %2080 = vmatpush2.msra.mxu0 0.0
    %2081 = vmatprep.subr.mxu0 0.0
    %2082 = vmatpush2.msra.mxu0 0.0
    %2083 = vmatprep.subr.mxu0 0.0
    %2084 = vmatpush2.msra.mxu0 0.0
    %2085 = vmatprep.subr.mxu0 0.0
    %2086 = vmatpush2.msra.mxu0 0.0
    %2087 = vmatprep.subr.mxu0 0.0
    %2088 = vmatpush2.msra.mxu0 0.0
    %2089 = vmatprep.subr.mxu0 0.0
    %2090 = vmatpush2.msra.mxu0 0.0
    %2091 = vmatprep.subr.mxu0 0.0
    %2092 = vmatpush2.msra.mxu0 0.0
    %2093 = vmatprep.subr.mxu0 0.0
    %2094 = vmatpush2.msra.mxu0 0.0
    %2095 = vmatprep.subr.mxu0 0.0
    %2096 = vmatpush2.msra.mxu0 0.0
    %2097 = vmatprep.subr.mxu0 0.0
    %2098 = vmatpush2.msra.mxu0 0.0
    %2099 = vmatprep.subr.mxu0 0.0
    %2100 = vmatpush2.msra.mxu0 0.0
    %2101 = vmatprep.subr.mxu0 0.0
    %2102 = vmatpush2.msra.mxu0 0.0
    %2103 = vmatprep.subr.mxu0 0.0
    %2104 = vmatpush2.msra.mxu0 0.0
    %2105 = vmatprep.mubr.f32.mxu0 0.0
    %2106 = vmatmul.mubr.f32.gmra.mxu0 %v2039
    %v2107 = vpop.f32.mrf.mxu0
    %v2108 = vadd.f32 0.0, %v2107
    %v2109 = vpop.f32.mrf.mxu0
    %2110 = vdwg.mxu0
    %v2112 = vsel %vm690, %v1571, 0
    %2114 = vmatprep.subr.mxu0 0.0
    %2115 = vmatpush1.msra.mxu0 0.0
    %2116 = vmatprep.subr.mxu0 0.0
    %2117 = vmatpush1.msra.mxu0 0.0
    %2118 = vmatprep.subr.mxu0 0.0
    %2119 = vmatpush1.msra.mxu0 0.0
    %2120 = vmatprep.subr.mxu0 0.0
    %2121 = vmatpush1.msra.mxu0 0.0
    %2122 = vmatprep.subr.mxu0 0.0
    %2123 = vmatpush1.msra.mxu0 0.0
    %2124 = vmatprep.subr.mxu0 0.0
    %2125 = vmatpush1.msra.mxu0 0.0
    %2126 = vmatprep.subr.mxu0 0.0
    %2127 = vmatpush1.msra.mxu0 0.0
    %2128 = vmatprep.subr.mxu0 0.0
    %2129 = vmatpush1.msra.mxu0 0.0
    %2130 = vmatprep.subr.mxu0 0.0
    %2131 = vmatpush1.msra.mxu0 0.0
    %2132 = vmatprep.subr.mxu0 0.0
    %2133 = vmatpush1.msra.mxu0 0.0
    %2134 = vmatprep.subr.mxu0 0.0
    %2135 = vmatpush1.msra.mxu0 0.0
    %2136 = vmatprep.subr.mxu0 0.0
    %2137 = vmatpush1.msra.mxu0 0.0
    %2138 = vmatprep.subr.mxu0 0.0
    %2139 = vmatpush1.msra.mxu0 0.0
    %2140 = vmatprep.subr.mxu0 0.0
    %2141 = vmatpush1.msra.mxu0 0.0
    %2142 = vmatprep.subr.mxu0 0.0
    %2143 = vmatpush1.msra.mxu0 0.0
    %2144 = vmatprep.subr.mxu0 0.0
    %2145 = vmatpush1.msra.mxu0 %v2031
    %2146 = vmatprep.subr.mxu0 0.0
    %2147 = vmatpush2.msra.mxu0 0.0
    %2148 = vmatprep.subr.mxu0 0.0
    %2149 = vmatpush2.msra.mxu0 0.0
    %2150 = vmatprep.subr.mxu0 0.0
    %2151 = vmatpush2.msra.mxu0 0.0
    %2152 = vmatprep.subr.mxu0 0.0
    %2153 = vmatpush2.msra.mxu0 0.0
    %2154 = vmatprep.subr.mxu0 0.0
    %2155 = vmatpush2.msra.mxu0 0.0
    %2156 = vmatprep.subr.mxu0 0.0
    %2157 = vmatpush2.msra.mxu0 0.0
    %2158 = vmatprep.subr.mxu0 0.0
    %2159 = vmatpush2.msra.mxu0 0.0
    %2160 = vmatprep.subr.mxu0 0.0
    %2161 = vmatpush2.msra.mxu0 0.0
    %2162 = vmatprep.subr.mxu0 0.0
    %2163 = vmatpush2.msra.mxu0 0.0
    %2164 = vmatprep.subr.mxu0 0.0
    %2165 = vmatpush2.msra.mxu0 0.0
    %2166 = vmatprep.subr.mxu0 0.0
    %2167 = vmatpush2.msra.mxu0 0.0
    %2168 = vmatprep.subr.mxu0 0.0
    %2169 = vmatpush2.msra.mxu0 0.0
    %2170 = vmatprep.subr.mxu0 0.0
    %2171 = vmatpush2.msra.mxu0 0.0
    %2172 = vmatprep.subr.mxu0 0.0
    %2173 = vmatpush2.msra.mxu0 0.0
    %2174 = vmatprep.subr.mxu0 0.0
    %2175 = vmatpush2.msra.mxu0 0.0
    %2176 = vmatprep.subr.mxu0 0.0
    %2177 = vmatpush2.msra.mxu0 0.0
    %2178 = vmatprep.mubr.f32.mxu0 0.0
    %2179 = vmatmul.mubr.f32.gmra.mxu0 %v2112
    %v2180 = vpop.f32.mrf.mxu0
    %v2181 = vadd.f32 0.0, %v2180
    %v2182 = vpop.f32.mrf.mxu0
    %2183 = vdwg.mxu0
    %v2185 = vsel %vm690, %v1647, 0
    %2187 = vmatprep.subr.mxu0 0.0
    %2188 = vmatpush1.msra.mxu0 0.0
    %2189 = vmatprep.subr.mxu0 0.0
    %2190 = vmatpush1.msra.mxu0 0.0
    %2191 = vmatprep.subr.mxu0 0.0
    %2192 = vmatpush1.msra.mxu0 0.0
    %2193 = vmatprep.subr.mxu0 0.0
    %2194 = vmatpush1.msra.mxu0 0.0
    %2195 = vmatprep.subr.mxu0 0.0
    %2196 = vmatpush1.msra.mxu0 0.0
    %2197 = vmatprep.subr.mxu0 0.0
    %2198 = vmatpush1.msra.mxu0 0.0
    %2199 = vmatprep.subr.mxu0 0.0
    %2200 = vmatpush1.msra.mxu0 0.0
    %2201 = vmatprep.subr.mxu0 0.0
    %2202 = vmatpush1.msra.mxu0 0.0
    %2203 = vmatprep.subr.mxu0 0.0
    %2204 = vmatpush1.msra.mxu0 0.0
    %2205 = vmatprep.subr.mxu0 0.0
    %2206 = vmatpush1.msra.mxu0 0.0
    %2207 = vmatprep.subr.mxu0 0.0
    %2208 = vmatpush1.msra.mxu0 0.0
    %2209 = vmatprep.subr.mxu0 0.0
    %2210 = vmatpush1.msra.mxu0 0.0
    %2211 = vmatprep.subr.mxu0 0.0
    %2212 = vmatpush1.msra.mxu0 0.0
    %2213 = vmatprep.subr.mxu0 0.0
    %2214 = vmatpush1.msra.mxu0 0.0
    %2215 = vmatprep.subr.mxu0 0.0
    %2216 = vmatpush1.msra.mxu0 0.0
    %2217 = vmatprep.subr.mxu0 0.0
    %2218 = vmatpush1.msra.mxu0 %v2032
    %2219 = vmatprep.subr.mxu0 0.0
    %2220 = vmatpush2.msra.mxu0 0.0
    %2221 = vmatprep.subr.mxu0 0.0
    %2222 = vmatpush2.msra.mxu0 0.0
    %2223 = vmatprep.subr.mxu0 0.0
    %2224 = vmatpush2.msra.mxu0 0.0
    %2225 = vmatprep.subr.mxu0 0.0
    %2226 = vmatpush2.msra.mxu0 0.0
    %2227 = vmatprep.subr.mxu0 0.0
    %2228 = vmatpush2.msra.mxu0 0.0
    %2229 = vmatprep.subr.mxu0 0.0
    %2230 = vmatpush2.msra.mxu0 0.0
    %2231 = vmatprep.subr.mxu0 0.0
    %2232 = vmatpush2.msra.mxu0 0.0
    %2233 = vmatprep.subr.mxu0 0.0
    %2234 = vmatpush2.msra.mxu0 0.0
    %2235 = vmatprep.subr.mxu0 0.0
    %2236 = vmatpush2.msra.mxu0 0.0
    %2237 = vmatprep.subr.mxu0 0.0
    %2238 = vmatpush2.msra.mxu0 0.0
    %2239 = vmatprep.subr.mxu0 0.0
    %2240 = vmatpush2.msra.mxu0 0.0
    %2241 = vmatprep.subr.mxu0 0.0
    %2242 = vmatpush2.msra.mxu0 0.0
    %2243 = vmatprep.subr.mxu0 0.0
    %2244 = vmatpush2.msra.mxu0 0.0
    %2245 = vmatprep.subr.mxu0 0.0
    %2246 = vmatpush2.msra.mxu0 0.0
    %2247 = vmatprep.subr.mxu0 0.0
    %2248 = vmatpush2.msra.mxu0 0.0
    %2249 = vmatprep.subr.mxu0 0.0
    %2250 = vmatpush2.msra.mxu0 0.0
    %2251 = vmatprep.mubr.f32.mxu0 0.0
    %2252 = vmatmul.mubr.f32.gmra.mxu0 %v2185
    %v2253 = vpop.f32.mrf.mxu0
    %v2254 = vadd.f32 0.0, %v2253
    %v2255 = vpop.f32.mrf.mxu0
    %2256 = vdwg.mxu0
    %v2258 = vsel %vm690, %v1723, 0
    %2260 = vmatprep.subr.mxu0 0.0
    %2261 = vmatpush1.msra.mxu0 0.0
    %2262 = vmatprep.subr.mxu0 0.0
    %2263 = vmatpush1.msra.mxu0 0.0
    %2264 = vmatprep.subr.mxu0 0.0
    %2265 = vmatpush1.msra.mxu0 0.0
    %2266 = vmatprep.subr.mxu0 0.0
    %2267 = vmatpush1.msra.mxu0 0.0
    %2268 = vmatprep.subr.mxu0 0.0
    %2269 = vmatpush1.msra.mxu0 0.0
    %2270 = vmatprep.subr.mxu0 0.0
    %2271 = vmatpush1.msra.mxu0 0.0
    %2272 = vmatprep.subr.mxu0 0.0
    %2273 = vmatpush1.msra.mxu0 0.0
    %2274 = vmatprep.subr.mxu0 0.0
    %2275 = vmatpush1.msra.mxu0 0.0
    %2276 = vmatprep.subr.mxu0 0.0
    %2277 = vmatpush1.msra.mxu0 0.0
    %2278 = vmatprep.subr.mxu0 0.0
    %2279 = vmatpush1.msra.mxu0 0.0
    %2280 = vmatprep.subr.mxu0 0.0
    %2281 = vmatpush1.msra.mxu0 0.0
    %2282 = vmatprep.subr.mxu0 0.0
    %2283 = vmatpush1.msra.mxu0 0.0
    %2284 = vmatprep.subr.mxu0 0.0
    %2285 = vmatpush1.msra.mxu0 0.0
    %2286 = vmatprep.subr.mxu0 0.0
    %2287 = vmatpush1.msra.mxu0 0.0
    %2288 = vmatprep.subr.mxu0 0.0
    %2289 = vmatpush1.msra.mxu0 0.0
    %2290 = vmatprep.subr.mxu0 0.0
    %2291 = vmatpush1.msra.mxu0 %v2033
    %2292 = vmatprep.subr.mxu0 0.0
    %2293 = vmatpush2.msra.mxu0 0.0
    %2294 = vmatprep.subr.mxu0 0.0
    %2295 = vmatpush2.msra.mxu0 0.0
    %2296 = vmatprep.subr.mxu0 0.0
    %2297 = vmatpush2.msra.mxu0 0.0
    %2298 = vmatprep.subr.mxu0 0.0
    %2299 = vmatpush2.msra.mxu0 0.0
    %2300 = vmatprep.subr.mxu0 0.0
    %2301 = vmatpush2.msra.mxu0 0.0
    %2302 = vmatprep.subr.mxu0 0.0
    %2303 = vmatpush2.msra.mxu0 0.0
    %2304 = vmatprep.subr.mxu0 0.0
    %2305 = vmatpush2.msra.mxu0 0.0
    %2306 = vmatprep.subr.mxu0 0.0
    %2307 = vmatpush2.msra.mxu0 0.0
    %2308 = vmatprep.subr.mxu0 0.0
    %2309 = vmatpush2.msra.mxu0 0.0
    %2310 = vmatprep.subr.mxu0 0.0
    %2311 = vmatpush2.msra.mxu0 0.0
    %2312 = vmatprep.subr.mxu0 0.0
    %2313 = vmatpush2.msra.mxu0 0.0
    %2314 = vmatprep.subr.mxu0 0.0
    %2315 = vmatpush2.msra.mxu0 0.0
    %2316 = vmatprep.subr.mxu0 0.0
    %2317 = vmatpush2.msra.mxu0 0.0
    %2318 = vmatprep.subr.mxu0 0.0
    %2319 = vmatpush2.msra.mxu0 0.0
    %2320 = vmatprep.subr.mxu0 0.0
    %2321 = vmatpush2.msra.mxu0 0.0
    %2322 = vmatprep.subr.mxu0 0.0
    %2323 = vmatpush2.msra.mxu0 0.0
    %2324 = vmatprep.mubr.f32.mxu0 0.0
    %2325 = vmatmul.mubr.f32.gmra.mxu0 %v2258
    %v2326 = vpop.f32.mrf.mxu0
    %v2327 = vadd.f32 0.0, %v2326
    %v2328 = vpop.f32.mrf.mxu0
    %2329 = vdwg.mxu0
    %v2331 = vsel %vm690, %v1799, 0
    %2333 = vmatprep.subr.mxu0 0.0
    %2334 = vmatpush1.msra.mxu0 0.0
    %2335 = vmatprep.subr.mxu0 0.0
    %2336 = vmatpush1.msra.mxu0 0.0
    %2337 = vmatprep.subr.mxu0 0.0
    %2338 = vmatpush1.msra.mxu0 0.0
    %2339 = vmatprep.subr.mxu0 0.0
    %2340 = vmatpush1.msra.mxu0 0.0
    %2341 = vmatprep.subr.mxu0 0.0
    %2342 = vmatpush1.msra.mxu0 0.0
    %2343 = vmatprep.subr.mxu0 0.0
    %2344 = vmatpush1.msra.mxu0 0.0
    %2345 = vmatprep.subr.mxu0 0.0
    %2346 = vmatpush1.msra.mxu0 0.0
    %2347 = vmatprep.subr.mxu0 0.0
    %2348 = vmatpush1.msra.mxu0 0.0
    %2349 = vmatprep.subr.mxu0 0.0
    %2350 = vmatpush1.msra.mxu0 0.0
    %2351 = vmatprep.subr.mxu0 0.0
    %2352 = vmatpush1.msra.mxu0 0.0
    %2353 = vmatprep.subr.mxu0 0.0
    %2354 = vmatpush1.msra.mxu0 0.0
    %2355 = vmatprep.subr.mxu0 0.0
    %2356 = vmatpush1.msra.mxu0 0.0
    %2357 = vmatprep.subr.mxu0 0.0
    %2358 = vmatpush1.msra.mxu0 0.0
    %2359 = vmatprep.subr.mxu0 0.0
    %2360 = vmatpush1.msra.mxu0 0.0
    %2361 = vmatprep.subr.mxu0 0.0
    %2362 = vmatpush1.msra.mxu0 0.0
    %2363 = vmatprep.subr.mxu0 0.0
    %2364 = vmatpush1.msra.mxu0 %v2034
    %2365 = vmatprep.subr.mxu0 0.0
    %2366 = vmatpush2.msra.mxu0 0.0
    %2367 = vmatprep.subr.mxu0 0.0
    %2368 = vmatpush2.msra.mxu0 0.0
    %2369 = vmatprep.subr.mxu0 0.0
    %2370 = vmatpush2.msra.mxu0 0.0
    %2371 = vmatprep.subr.mxu0 0.0
    %2372 = vmatpush2.msra.mxu0 0.0
    %2373 = vmatprep.subr.mxu0 0.0
    %2374 = vmatpush2.msra.mxu0 0.0
    %2375 = vmatprep.subr.mxu0 0.0
    %2376 = vmatpush2.msra.mxu0 0.0
    %2377 = vmatprep.subr.mxu0 0.0
    %2378 = vmatpush2.msra.mxu0 0.0
    %2379 = vmatprep.subr.mxu0 0.0
    %2380 = vmatpush2.msra.mxu0 0.0
    %2381 = vmatprep.subr.mxu0 0.0
    %2382 = vmatpush2.msra.mxu0 0.0
    %2383 = vmatprep.subr.mxu0 0.0
    %2384 = vmatpush2.msra.mxu0 0.0
    %2385 = vmatprep.subr.mxu0 0.0
    %2386 = vmatpush2.msra.mxu0 0.0
    %2387 = vmatprep.subr.mxu0 0.0
    %2388 = vmatpush2.msra.mxu0 0.0
    %2389 = vmatprep.subr.mxu0 0.0
    %2390 = vmatpush2.msra.mxu0 0.0
    %2391 = vmatprep.subr.mxu0 0.0
    %2392 = vmatpush2.msra.mxu0 0.0
    %2393 = vmatprep.subr.mxu0 0.0
    %2394 = vmatpush2.msra.mxu0 0.0
    %2395 = vmatprep.subr.mxu0 0.0
    %2396 = vmatpush2.msra.mxu0 0.0
    %2397 = vmatprep.mubr.f32.mxu0 0.0
    %2398 = vmatmul.mubr.f32.gmra.mxu0 %v2331
    %v2399 = vpop.f32.mrf.mxu0
    %v2400 = vadd.f32 0.0, %v2399
    %v2401 = vpop.f32.mrf.mxu0
    %2402 = vdwg.mxu0
    %v2404 = vsel %vm690, %v1875, 0
    %2406 = vmatprep.subr.mxu0 0.0
    %2407 = vmatpush1.msra.mxu0 0.0
    %2408 = vmatprep.subr.mxu0 0.0
    %2409 = vmatpush1.msra.mxu0 0.0
    %2410 = vmatprep.subr.mxu0 0.0
    %2411 = vmatpush1.msra.mxu0 0.0
    %2412 = vmatprep.subr.mxu0 0.0
    %2413 = vmatpush1.msra.mxu0 0.0
    %2414 = vmatprep.subr.mxu0 0.0
    %2415 = vmatpush1.msra.mxu0 0.0
    %2416 = vmatprep.subr.mxu0 0.0
    %2417 = vmatpush1.msra.mxu0 0.0
    %2418 = vmatprep.subr.mxu0 0.0
    %2419 = vmatpush1.msra.mxu0 0.0
    %2420 = vmatprep.subr.mxu0 0.0
    %2421 = vmatpush1.msra.mxu0 0.0
    %2422 = vmatprep.subr.mxu0 0.0
    %2423 = vmatpush1.msra.mxu0 0.0
    %2424 = vmatprep.subr.mxu0 0.0
    %2425 = vmatpush1.msra.mxu0 0.0
    %2426 = vmatprep.subr.mxu0 0.0
    %2427 = vmatpush1.msra.mxu0 0.0
    %2428 = vmatprep.subr.mxu0 0.0
    %2429 = vmatpush1.msra.mxu0 0.0
    %2430 = vmatprep.subr.mxu0 0.0
    %2431 = vmatpush1.msra.mxu0 0.0
    %2432 = vmatprep.subr.mxu0 0.0
    %2433 = vmatpush1.msra.mxu0 0.0
    %2434 = vmatprep.subr.mxu0 0.0
    %2435 = vmatpush1.msra.mxu0 0.0
    %2436 = vmatprep.subr.mxu0 0.0
    %2437 = vmatpush1.msra.mxu0 %v2035
    %2438 = vmatprep.subr.mxu0 0.0
    %2439 = vmatpush2.msra.mxu0 0.0
    %2440 = vmatprep.subr.mxu0 0.0
    %2441 = vmatpush2.msra.mxu0 0.0
    %2442 = vmatprep.subr.mxu0 0.0
    %2443 = vmatpush2.msra.mxu0 0.0
    %2444 = vmatprep.subr.mxu0 0.0
    %2445 = vmatpush2.msra.mxu0 0.0
    %2446 = vmatprep.subr.mxu0 0.0
    %2447 = vmatpush2.msra.mxu0 0.0
    %2448 = vmatprep.subr.mxu0 0.0
    %2449 = vmatpush2.msra.mxu0 0.0
    %2450 = vmatprep.subr.mxu0 0.0
    %2451 = vmatpush2.msra.mxu0 0.0
    %2452 = vmatprep.subr.mxu0 0.0
    %2453 = vmatpush2.msra.mxu0 0.0
    %2454 = vmatprep.subr.mxu0 0.0
    %2455 = vmatpush2.msra.mxu0 0.0
    %2456 = vmatprep.subr.mxu0 0.0
    %2457 = vmatpush2.msra.mxu0 0.0
    %2458 = vmatprep.subr.mxu0 0.0
    %2459 = vmatpush2.msra.mxu0 0.0
    %2460 = vmatprep.subr.mxu0 0.0
    %2461 = vmatpush2.msra.mxu0 0.0
    %2462 = vmatprep.subr.mxu0 0.0
    %2463 = vmatpush2.msra.mxu0 0.0
    %2464 = vmatprep.subr.mxu0 0.0
    %2465 = vmatpush2.msra.mxu0 0.0
    %2466 = vmatprep.subr.mxu0 0.0
    %2467 = vmatpush2.msra.mxu0 0.0
    %2468 = vmatprep.subr.mxu0 0.0
    %2469 = vmatpush2.msra.mxu0 0.0
    %2470 = vmatprep.mubr.f32.mxu0 0.0
    %2471 = vmatmul.mubr.f32.gmra.mxu0 %v2404
    %v2472 = vpop.f32.mrf.mxu0
    %v2473 = vadd.f32 0.0, %v2472
    %v2474 = vpop.f32.mrf.mxu0
    %2475 = vdwg.mxu0
    %v2477 = vsel %vm690, %v1951, 0
    %2479 = vmatprep.subr.mxu0 0.0
    %2480 = vmatpush1.msra.mxu0 0.0
    %2481 = vmatprep.subr.mxu0 0.0
    %2482 = vmatpush1.msra.mxu0 0.0
    %2483 = vmatprep.subr.mxu0 0.0
    %2484 = vmatpush1.msra.mxu0 0.0
    %2485 = vmatprep.subr.mxu0 0.0
    %2486 = vmatpush1.msra.mxu0 0.0
    %2487 = vmatprep.subr.mxu0 0.0
    %2488 = vmatpush1.msra.mxu0 0.0
    %2489 = vmatprep.subr.mxu0 0.0
    %2490 = vmatpush1.msra.mxu0 0.0
    %2491 = vmatprep.subr.mxu0 0.0
    %2492 = vmatpush1.msra.mxu0 0.0
    %2493 = vmatprep.subr.mxu0 0.0
    %2494 = vmatpush1.msra.mxu0 0.0
    %2495 = vmatprep.subr.mxu0 0.0
    %2496 = vmatpush1.msra.mxu0 0.0
    %2497 = vmatprep.subr.mxu0 0.0
    %2498 = vmatpush1.msra.mxu0 0.0
    %2499 = vmatprep.subr.mxu0 0.0
    %2500 = vmatpush1.msra.mxu0 0.0
    %2501 = vmatprep.subr.mxu0 0.0
    %2502 = vmatpush1.msra.mxu0 0.0
    %2503 = vmatprep.subr.mxu0 0.0
    %2504 = vmatpush1.msra.mxu0 0.0
    %2505 = vmatprep.subr.mxu0 0.0
    %2506 = vmatpush1.msra.mxu0 0.0
    %2507 = vmatprep.subr.mxu0 0.0
    %2508 = vmatpush1.msra.mxu0 0.0
    %2509 = vmatprep.subr.mxu0 0.0
    %2510 = vmatpush1.msra.mxu0 %v2036
    %2511 = vmatprep.subr.mxu0 0.0
    %2512 = vmatpush2.msra.mxu0 0.0
    %2513 = vmatprep.subr.mxu0 0.0
    %2514 = vmatpush2.msra.mxu0 0.0
    %2515 = vmatprep.subr.mxu0 0.0
    %2516 = vmatpush2.msra.mxu0 0.0
    %2517 = vmatprep.subr.mxu0 0.0
    %2518 = vmatpush2.msra.mxu0 0.0
    %2519 = vmatprep.subr.mxu0 0.0
    %2520 = vmatpush2.msra.mxu0 0.0
    %2521 = vmatprep.subr.mxu0 0.0
    %2522 = vmatpush2.msra.mxu0 0.0
    %2523 = vmatprep.subr.mxu0 0.0
    %2524 = vmatpush2.msra.mxu0 0.0
    %2525 = vmatprep.subr.mxu0 0.0
    %2526 = vmatpush2.msra.mxu0 0.0
    %2527 = vmatprep.subr.mxu0 0.0
    %2528 = vmatpush2.msra.mxu0 0.0
    %2529 = vmatprep.subr.mxu0 0.0
    %2530 = vmatpush2.msra.mxu0 0.0
    %2531 = vmatprep.subr.mxu0 0.0
    %2532 = vmatpush2.msra.mxu0 0.0
    %2533 = vmatprep.subr.mxu0 0.0
    %2534 = vmatpush2.msra.mxu0 0.0
    %2535 = vmatprep.subr.mxu0 0.0
    %2536 = vmatpush2.msra.mxu0 0.0
    %2537 = vmatprep.subr.mxu0 0.0
    %2538 = vmatpush2.msra.mxu0 0.0
    %2539 = vmatprep.subr.mxu0 0.0
    %2540 = vmatpush2.msra.mxu0 0.0
    %2541 = vmatprep.subr.mxu0 0.0
    %2542 = vmatpush2.msra.mxu0 0.0
    %2543 = vmatprep.mubr.f32.mxu0 0.0
    %2544 = vmatmul.mubr.f32.gmra.mxu0 %v2477
    %v2545 = vpop.f32.mrf.mxu0
    %v2546 = vadd.f32 0.0, %v2545
    %v2547 = vpop.f32.mrf.mxu0
    %2548 = vdwg.mxu0
    %v2550 = vsel %vm690, %v2027, 0
    %2552 = vmatprep.subr.mxu0 0.0
    %2553 = vmatpush1.msra.mxu0 0.0
    %2554 = vmatprep.subr.mxu0 0.0
    %2555 = vmatpush1.msra.mxu0 0.0
    %2556 = vmatprep.subr.mxu0 0.0
    %2557 = vmatpush1.msra.mxu0 0.0
    %2558 = vmatprep.subr.mxu0 0.0
    %2559 = vmatpush1.msra.mxu0 0.0
    %2560 = vmatprep.subr.mxu0 0.0
    %2561 = vmatpush1.msra.mxu0 0.0
    %2562 = vmatprep.subr.mxu0 0.0
    %2563 = vmatpush1.msra.mxu0 0.0
    %2564 = vmatprep.subr.mxu0 0.0
    %2565 = vmatpush1.msra.mxu0 0.0
    %2566 = vmatprep.subr.mxu0 0.0
    %2567 = vmatpush1.msra.mxu0 0.0
    %2568 = vmatprep.subr.mxu0 0.0
    %2569 = vmatpush1.msra.mxu0 0.0
    %2570 = vmatprep.subr.mxu0 0.0
    %2571 = vmatpush1.msra.mxu0 0.0
    %2572 = vmatprep.subr.mxu0 0.0
    %2573 = vmatpush1.msra.mxu0 0.0
    %2574 = vmatprep.subr.mxu0 0.0
    %2575 = vmatpush1.msra.mxu0 0.0
    %2576 = vmatprep.subr.mxu0 0.0
    %2577 = vmatpush1.msra.mxu0 0.0
    %2578 = vmatprep.subr.mxu0 0.0
    %2579 = vmatpush1.msra.mxu0 0.0
    %2580 = vmatprep.subr.mxu0 0.0
    %2581 = vmatpush1.msra.mxu0 0.0
    %2582 = vmatprep.subr.mxu0 0.0
    %2583 = vmatpush1.msra.mxu0 %v2037
    %2584 = vmatprep.subr.mxu0 0.0
    %2585 = vmatpush2.msra.mxu0 0.0
    %2586 = vmatprep.subr.mxu0 0.0
    %2587 = vmatpush2.msra.mxu0 0.0
    %2588 = vmatprep.subr.mxu0 0.0
    %2589 = vmatpush2.msra.mxu0 0.0
    %2590 = vmatprep.subr.mxu0 0.0
    %2591 = vmatpush2.msra.mxu0 0.0
    %2592 = vmatprep.subr.mxu0 0.0
    %2593 = vmatpush2.msra.mxu0 0.0
    %2594 = vmatprep.subr.mxu0 0.0
    %2595 = vmatpush2.msra.mxu0 0.0
    %2596 = vmatprep.subr.mxu0 0.0
    %2597 = vmatpush2.msra.mxu0 0.0
    %2598 = vmatprep.subr.mxu0 0.0
    %2599 = vmatpush2.msra.mxu0 0.0
    %2600 = vmatprep.subr.mxu0 0.0
    %2601 = vmatpush2.msra.mxu0 0.0
    %2602 = vmatprep.subr.mxu0 0.0
    %2603 = vmatpush2.msra.mxu0 0.0
    %2604 = vmatprep.subr.mxu0 0.0
    %2605 = vmatpush2.msra.mxu0 0.0
    %2606 = vmatprep.subr.mxu0 0.0
    %2607 = vmatpush2.msra.mxu0 0.0
    %2608 = vmatprep.subr.mxu0 0.0
    %2609 = vmatpush2.msra.mxu0 0.0
    %2610 = vmatprep.subr.mxu0 0.0
    %2611 = vmatpush2.msra.mxu0 0.0
    %2612 = vmatprep.subr.mxu0 0.0
    %2613 = vmatpush2.msra.mxu0 0.0
    %2614 = vmatprep.subr.mxu0 0.0
    %2615 = vmatpush2.msra.mxu0 0.0
    %2616 = vmatprep.mubr.f32.mxu0 0.0
    %2617 = vmatmul.mubr.f32.gmra.mxu0 %v2550
    %v2618 = vpop.f32.mrf.mxu0
    %v2619 = vadd.f32 0.0, %v2618
    %v2620 = vpop.f32.mrf.mxu0
    %2621 = vdwg.mxu0
    %v2622 = vsel %vm123, %v2108, 0.0
    %v2623 = vsel %vm123, %v2181, 0.0
    %v2624 = vadd.f32 %v2622, %v2623
    %v2625 = vsel %vm123, %v2254, 0.0
    %v2626 = vadd.f32 %v2624, %v2625
    %v2627 = vsel %vm123, %v2327, 0.0
    %v2628 = vadd.f32 %v2626, %v2627
    %v2629 = vsel %vm123, %v2400, 0.0
    %v2630 = vsel %vm123, %v2473, 0.0
    %v2631 = vadd.f32 %v2629, %v2630
    %v2632 = vsel %vm123, %v2546, 0.0
    %v2633 = vadd.f32 %v2631, %v2632
    %v2634 = vsel %vm123, %v2619, 0.0
    %v2635 = vadd.f32 %v2633, %v2634
    %v2636 = vld [vmem:[%s5] sm:$0x1]
    %v2638 = vlaneseq
    %v2639 = vshrl.u32 %v2638, 7
    %v2640 = vsub.s32 0, %v2639
    %v2641 = vrot.slane %v2636, %v2640
    %v2643 = vadd.f32 %v2628, %v2641
    %v2644 = vadd.f32 %v2635, %v2641
    %v2645 = vadd.f32 %v33, %v2643
    %v2646 = vadd.f32 %v34, %v2644
    %v2647 = vsel %vm123, %v2645, 0.0
    %2648 = vadd.xlane.f32.xlu0 %v2647
    %v2649 = vpop.xlane.xlu0 %2648
    %v2650 = vsel %vm123, %v2646, 0.0
    %2651 = vadd.xlane.f32.xlu0 %v2650
    %v2652 = vpop.xlane.xlu0 %2651
    %v2653 = vrcp.pop 32.0
    %v2654 = vmul.f32 %v2649, %v2653
    %v2655 = vmul.f32 %v2652, %v2653
    %v2656 = vsub.f32 %v2645, %v2654
    %v2657 = vsub.f32 %v2646, %v2655
    %v2658 = vmul.f32 %v2656, %v2656
    %v2659 = vmul.f32 %v2657, %v2657
    %v2660 = vsel %vm123, %v2658, 0.0
    %2661 = vadd.xlane.f32.xlu0 %v2660
    %v2662 = vpop.xlane.xlu0 %2661
    %v2663 = vsel %vm123, %v2659, 0.0
    %2664 = vadd.xlane.f32.xlu0 %v2663
    %v2665 = vpop.xlane.xlu0 %2664
    %v2666 = vmul.f32 %v2662, %v2653
    %v2667 = vmul.f32 %v2665, %v2653
    %v2668 = vadd.f32 %v2666, 1e-05
    %v2669 = vadd.f32 %v2667, 1e-05
    %v2670 = vrsqrt.pop %v2668
    %v2671 = vrsqrt.pop %v2669
    %v2672 = vmul.f32 %v2656, %v2670
    %v2673 = vmul.f32 %v2657, %v2671
    %v2674 = vld [vmem:[%s6] sm:$0x1]
    %v2676 = vlaneseq
    %v2677 = vshrl.u32 %v2676, 7
    %v2678 = vsub.s32 0, %v2677
    %v2679 = vrot.slane %v2674, %v2678
    %v2681 = vmul.f32 %v2672, %v2679
    %v2682 = vmul.f32 %v2673, %v2679
    %v2683 = vld [vmem:[%s7] sm:$0x1]
    %v2685 = vlaneseq
    %v2686 = vshrl.u32 %v2685, 7
    %v2687 = vsub.s32 0, %v2686
    %v2688 = vrot.slane %v2683, %v2687
    %v2690 = vadd.f32 %v2681, %v2688
    %v2691 = vadd.f32 %v2682, %v2688
    %2692 = vst.msk [vmem:[#allocation2] sm:$0xff] %vm123, %v2690
    %2693 = vst.msk [vmem:[#allocation2 + $0x8] sm:$0xff] %vm123, %v2691
    // Predicated region
    $region34: #{tpu_custom_call.1} parent=1 // pred_check
      _
    $region35: #{tpu_custom_call.1} parent=1 // pred_check_branch
      %2695 = sbr.rel (0) target = $region37
    $region36: #{tpu_custom_call.1} parent=1 // pred_region
      %s2697 = ssub.s32 256, 256
      %2698 = vsyncadd [#allocation3], %s2697
      %s2699 = sshll.u32 [#allocation2], 4
      %s2700 = int_to_ptr.vmem [resolvable:$true] %s2699
      %2705 = dma.vmem_to_hbm [thread:$0]  %s2700, 256, %s8, [#allocation3], 128, 128, 8
    $region37: #{tpu_custom_call.1} parent=1 // pred_fallthru
      _
    // Predicated region
    $region38: #{tpu_custom_call.1} parent=1 // pred_check
      _
    $region39: #{tpu_custom_call.1} parent=1 // pred_check_branch
      %2707 = sbr.rel (0) target = $region41
    $region40: #{tpu_custom_call.1} parent=1 // pred_region
      %s2709 = ssub.s32 1024, 1024
      %2710 = vsyncadd [#allocation5], %s2709
      %s2711 = sshll.u32 [#allocation4], 4
      %s2712 = int_to_ptr.vmem [resolvable:$true] %s2711
      %2717 = dma.vmem_to_hbm [thread:$0]  %s2712, 1024, %s9, [#allocation5], 128, 128, 8
    $region41: #{tpu_custom_call.1} parent=1 // pred_fallthru
      _
    // Predicated region
    $region42: #{tpu_custom_call.1} parent=1 // pred_check
      _
    $region43: #{tpu_custom_call.1} parent=1 // pred_check_branch
      %2719 = sbr.rel (0) target = $region45
    $region44: #{tpu_custom_call.1} parent=1 // pred_region
      %2720 = dma.done [#allocation3], 256
    $region45: #{tpu_custom_call.1} parent=1 // pred_fallthru
      _
    // Predicated region
    $region46: #{tpu_custom_call.1} parent=1 // pred_check
      _
    $region47: #{tpu_custom_call.1} parent=1 // pred_check_branch
      %2722 = sbr.rel (0) target = $region49
    $region48: #{tpu_custom_call.1} parent=1 // pred_region
      %2723 = dma.done [#allocation5], 1024
    $region49: #{tpu_custom_call.1} parent=1 // pred_fallthru
      _
    %2724 = vsyncpa [#allocation3], 1
    %2725 = vsyncpa [#allocation5], 1

</llo_original>
